<compile_context>
chip_gen: v7x
topology: tpu7x:2x2x1
jax: 0.10.0
libtpu: 0.0.40
codegen_flags: <defaults>
</compile_context>

<pallas_src>
import jax
import jax.numpy as jnp
from jax.experimental import pallas as pl
from jax.experimental.pallas import tpu as pltpu


# ----------------------------- model config ---------------------------------
VOCAB_SIZE   = 16
MAX_SEQ_LEN  = 8
EMB_DIM      = 32
BATCH_SIZE   = 2
BATCH_PAD    = 8                     # pad batch to the f32 sublane width
N_LAYERS     = 2
N_LSTM_UNITS = EMB_DIM // 2          # 16
CH_L2        = N_LSTM_UNITS // 2     # 8


# ------------------------------ Pallas kernel -------------------------------
def _lstm_ehr_kernel(
    gates0_ref,            # (S*Bp, 4H) f32  time-major per-token layer-0 gate
                           #                 contributions (x@Wih0 + b0, reordered,
                           #                 i/f/o pre-scaled by 0.5)
    state_ref,             # (4, Bp, H) f32  [h_l0, h_l1, c_l0, c_l1]
    wslab_ref,             # (H + S*H + CH_L2, 128) bf16:
                           #   rows [0:H]            = [whh0 | wih1]            (H, 8H)
                           #   rows [H+t*H:H+(t+1)H] = [whh1 | w1_t | 0pad]     (H, 128)
                           #   rows [H+S*H: +CH_L2]  = w2                       (CH_L2, V*S)
    bslab_ref,             # (3, 128) f32: row0=[b1(4H),0], row1=[bl1(C),0], row2=bl2(V*S)
    logits_ref,            # out: (Bp, V*S) f32
    enc_ref,               # out: (Bp, CH_L2) f32
):
    Bp = state_ref.shape[1]
    H  = state_ref.shape[2]
    S  = gates0_ref.shape[0] // Bp
    C  = enc_ref.shape[1]
    H3 = 3 * H
    H4 = 4 * H

    # Hoisted constant loads / broadcasts (kept out of the unrolled loop).
    wcat0 = wslab_ref[0:H, :]                                    # (H, 128) bf16
    b1_row = bslab_ref[0:1, :]                                   # (1, 128) f32
    b1b = jnp.broadcast_to(b1_row[:, :H4], (Bp, H4))             # (Bp, 4H)

    def cell(gates, c):
        # Gate columns are [i, f, o | g]; i/f/o pre-activations are pre-scaled
        # by 0.5 in the wrapper so one tanh pass covers all 4H lanes:
        #   sigmoid(x) = 0.5*tanh(x/2) + 0.5
        t_all = jnp.tanh(gates)                                  # one EUP pass
        ifo = t_all[:, :H3] * 0.5 + 0.5
        g = t_all[:, H3:]
        c_new = ifo[:, H:2 * H] * c + ifo[:, :H] * g
        h_new = ifo[:, 2 * H:H3] * jnp.tanh(c_new)
        return h_new, c_new

    h0 = state_ref[0]
    h1 = state_ref[1]
    c0 = state_ref[2]
    c1 = state_ref[3]

    # Prime the fused projections (only the [:4H] halves are consumed at t=0).
    proj0 = jnp.dot(h0.astype(jnp.bfloat16), wcat0,
                    preferred_element_type=jnp.float32)          # (Bp, 128)
    proj1 = jnp.dot(h1.astype(jnp.bfloat16), wslab_ref[H:2 * H, :],
                    preferred_element_type=jnp.float32)          # (Bp, 128)

    enc_acc = None
    for t in range(S):
        # ---- layer 0, step t (serial path: one push h @ [whh0|wih1]) ----
        g0 = gates0_ref[t * Bp:(t + 1) * Bp, :] + proj0[:, :H4]
        h0, c0 = cell(g0, c0)
        proj0 = jnp.dot(h0.astype(jnp.bfloat16), wcat0,
                        preferred_element_type=jnp.float32)
        gx1 = proj0[:, H4:] + b1b                                # layer-1 input proj

        # ---- layer 1, step t (one push h @ [whh1|w1_t]) ----
        g1 = gx1 + proj1[:, :H4]
        h1, c1 = cell(g1, c1)
        wcat1_t = wslab_ref[H + t * H:H + (t + 1) * H, :]        # one bf16 tile
        proj1 = jnp.dot(h1.astype(jnp.bfloat16), wcat1_t,
                        preferred_element_type=jnp.float32)
        contrib = proj1[:, H4:H4 + C]                            # h1_t @ w1[t*H:(t+1)*H]
        enc_acc = contrib if enc_acc is None else enc_acc + contrib

    # linear1 output (pre-ReLU) is `encoded_vect` in the PyTorch module.
    enc = enc_acc + bslab_ref[1:2, :][:, :C]
    enc_ref[...] = enc

    # relu -> linear2
    relu_enc = jnp.maximum(enc, 0.0)
    w2 = wslab_ref[H + S * H:H + S * H + C, :]                   # (C, V*S) bf16
    logits_ref[...] = (
        jnp.dot(relu_enc.astype(jnp.bfloat16), w2,
                preferred_element_type=jnp.float32)
        + bslab_ref[2:3, :]
    )                                                            # (Bp, V*S)


# ------------------------------ JAX wrapper ----------------------------------
def init_params(key):
    """Deterministic synthetic parameters matching the PyTorch module shapes."""
    ks = jax.random.split(key, 16)
    H, E, S, V = N_LSTM_UNITS, EMB_DIM, MAX_SEQ_LEN, VOCAB_SIZE
    scale = 0.1
    p = {
        "embedding": jax.random.normal(ks[0], (V, E), jnp.float32) * scale,
        # LSTM layer 0 (PyTorch stores (4H, in); we keep transposed (in, 4H))
        "wih0": jax.random.normal(ks[1], (E, 4 * H), jnp.float32) * scale,
        "whh0": jax.random.normal(ks[2], (H, 4 * H), jnp.float32) * scale,
        "bih0": jax.random.normal(ks[3], (4 * H,), jnp.float32) * scale,
        "bhh0": jax.random.normal(ks[4], (4 * H,), jnp.float32) * scale,
        # LSTM layer 1
        "wih1": jax.random.normal(ks[5], (H, 4 * H), jnp.float32) * scale,
        "whh1": jax.random.normal(ks[6], (H, 4 * H), jnp.float32) * scale,
        "bih1": jax.random.normal(ks[7], (4 * H,), jnp.float32) * scale,
        "bhh1": jax.random.normal(ks[8], (4 * H,), jnp.float32) * scale,
        # linear1: (CH_L2, H*S) in torch; transposed (H*S, CH_L2) here
        "w1": jax.random.normal(ks[9], (H * S, CH_L2), jnp.float32) * scale,
        "b1": jax.random.normal(ks[10], (CH_L2,), jnp.float32) * scale,
        # linear2: (V*S, CH_L2) in torch; transposed (CH_L2, V*S) here
        "w2": jax.random.normal(ks[11], (CH_L2, V * S), jnp.float32) * scale,
        "b2": jax.random.normal(ks[12], (V * S,), jnp.float32) * scale,
        # init_hidden(): torch.randn(n_layers, batch, hidden)
        "h0": jax.random.normal(ks[13], (N_LAYERS, BATCH_SIZE, H), jnp.float32),
        "c0": jax.random.normal(ks[14], (N_LAYERS, BATCH_SIZE, H), jnp.float32),
    }
    return p


@jax.jit
def lstm_ehr_encoding_forward(x, x_lengths, params):
    del x_lengths  # unused by the PyTorch forward (besides passing x through)
    B, S = x.shape
    V, H = VOCAB_SIZE, N_LSTM_UNITS
    Bp, C = BATCH_PAD, CH_L2
    H3, H4 = 3 * H, 4 * H

    def reorder(w):
        # PyTorch gate column order (i, f, g, o) -> (i, f, o, g): one contiguous
        # "sigmoid" slice [0:3H] and one tanh slice [3H:4H] in the kernel.
        return jnp.concatenate(
            [w[..., :2 * H], w[..., 3 * H:4 * H], w[..., 2 * H:3 * H]], axis=-1)

    def halve_ifo(w):
        # Pre-scale i/f/o columns by 0.5 so sigmoid(x) == 0.5*tanh(gate)+0.5.
        return jnp.concatenate([w[..., :H3] * 0.5, w[..., H3:]], axis=-1)

    # ---- fold wih0 + layer-0 biases into the embedding table ----
    g_table = params["embedding"] @ params["wih0"] + params["bih0"] + params["bhh0"]
    g_table = halve_ifo(reorder(g_table))                        # (V, 4H) f32

    # Time-major padded token gather -> per-step gate contributions.
    x_pad = jnp.zeros((Bp, S), jnp.int32).at[:B].set(x)
    x_tm = jnp.transpose(x_pad, (1, 0)).reshape(S * Bp)
    gates0 = jnp.take(g_table, x_tm, axis=0)                     # (S*Bp, 4H) f32

    # ---- recurrent weights (reordered, i/f/o halved) ----
    whh0 = halve_ifo(reorder(params["whh0"]))
    wih1 = halve_ifo(reorder(params["wih1"]))
    whh1 = halve_ifo(reorder(params["whh1"]))
    b1   = halve_ifo(reorder(params["bih1"] + params["bhh1"]))   # (4H,)

    # ---- bf16 weight slab: [whh0|wih1] ; per-t [whh1|w1_t|0] ; w2 ----
    wcat0 = jnp.concatenate([whh0, wih1], axis=1)                # (H, 8H) = (16, 128)
    w1 = params["w1"]                                            # (H*S, C)
    pad = jnp.zeros((H, 128 - H4 - C), jnp.float32)
    wcat1 = jnp.concatenate(
        [jnp.concatenate([whh1, w1[t * H:(t + 1) * H, :], pad], axis=1)
         for t in range(S)], axis=0)                             # (S*H, 128)
    wslab = jnp.concatenate([wcat0, wcat1, params["w2"]],
                            axis=0).astype(jnp.bfloat16)         # (H+S*H+C, 128)

    # ---- f32 bias slab ----
    b1_row  = jnp.pad(b1, (0, 128 - H4)).reshape(1, 128)
    bl1_row = jnp.pad(params["b1"], (0, 128 - C)).reshape(1, 128)
    bl2_row = params["b2"].reshape(1, V * S)                     # V*S == 128
    bslab = jnp.concatenate([b1_row, bl1_row, bl2_row], axis=0)  # (3, 128) f32

    # ---- padded initial state: [h_l0, h_l1, c_l0, c_l1] ----
    h0p = jnp.zeros((N_LAYERS, Bp, H), jnp.float32).at[:, :B].set(params["h0"])
    c0p = jnp.zeros((N_LAYERS, Bp, H), jnp.float32).at[:, :B].set(params["c0"])
    state = jnp.concatenate([h0p, c0p], axis=0)                  # (4, Bp, H)

    vmem = pl.BlockSpec(memory_space=pltpu.MemorySpace.VMEM)
    logits_flat, enc = pl.pallas_call(
        _lstm_ehr_kernel,
        out_shape=(
            jax.ShapeDtypeStruct((Bp, V * S), jnp.float32),
            jax.ShapeDtypeStruct((Bp, C), jnp.float32),
        ),
        in_specs=[vmem] * 4,
        out_specs=(vmem, vmem),
    )(gates0, state, wslab, bslab)

    # Drop padded batch rows; out.view(-1, vocab_size, seq_len)
    out = logits_flat[:B].reshape(B, V, S)
    encoded_vect = enc[:B]
    return out, encoded_vect


# --------------------------------- main --------------------------------------
if __name__ == "__main__":
    key = jax.random.PRNGKey(0)
    pkey, xkey = jax.random.split(key)

    params = init_params(pkey)

    # Token ids (B, S) and (unused) sequence lengths.
    x = jax.random.randint(xkey, (BATCH_SIZE, MAX_SEQ_LEN), 0, VOCAB_SIZE,
                           dtype=jnp.int32)
    x_lengths = jnp.full((BATCH_SIZE,), MAX_SEQ_LEN, dtype=jnp.int32)

    out, encoded_vect = lstm_ehr_encoding_forward(x, x_lengths, params)
    jax.block_until_ready((out, encoded_vect))

    assert out.shape == (BATCH_SIZE, VOCAB_SIZE, MAX_SEQ_LEN), out.shape
    assert encoded_vect.shape == (BATCH_SIZE, CH_L2), encoded_vect.shape
    print("KERNEL_OK")
</pallas_src>

<mosaic_0001>
module attributes {stable_mosaic.version = 11 : i64} {
  func.func @_lstm_ehr_kernel(%arg0: memref<64x64xf32, #tpu.memory_space<vmem>>, %arg1: memref<4x8x16xf32, #tpu.memory_space<vmem>>, %arg2: memref<152x128xbf16, #tpu.memory_space<vmem>>, %arg3: memref<3x128xf32, #tpu.memory_space<vmem>>, %arg4: memref<8x128xf32, #tpu.memory_space<vmem>>, %arg5: memref<8x8xf32, #tpu.memory_space<vmem>>) attributes {dimension_semantics = [], scalar_prefetch = 0 : i64, scratch_operands = 0 : i64, tpu.core_type = #tpu.core_type<tc>} {
    %c0 = arith.constant 0 : index
    %c0_0 = arith.constant 0 : index
    %0 = vector.load %arg2[%c0, %c0_0] : memref<152x128xbf16, #tpu.memory_space<vmem>>, vector<16x128xbf16>
    %c0_1 = arith.constant 0 : index
    %c0_2 = arith.constant 0 : index
    %1 = vector.load %arg3[%c0_1, %c0_2] : memref<3x128xf32, #tpu.memory_space<vmem>>, vector<1x128xf32>
    %2 = vector.extract_strided_slice %1 {offsets = [0, 0], sizes = [1, 64], strides = [1, 1]} : vector<1x128xf32> to vector<1x64xf32>
    %3 = vector.shape_cast %2 : vector<1x64xf32> to vector<1x64xf32>
    %4 = vector.broadcast %3 : vector<1x64xf32> to vector<8x64xf32>
    %c0_3 = arith.constant 0 : index
    %c0_4 = arith.constant 0 : index
    %c0_5 = arith.constant 0 : index
    %5 = vector.load %arg1[%c0_3, %c0_4, %c0_5] : memref<4x8x16xf32, #tpu.memory_space<vmem>>, vector<1x8x16xf32>
    %6 = vector.shape_cast %5 : vector<1x8x16xf32> to vector<8x16xf32>
    %c1 = arith.constant 1 : index
    %c0_6 = arith.constant 0 : index
    %c0_7 = arith.constant 0 : index
    %7 = vector.load %arg1[%c1, %c0_6, %c0_7] : memref<4x8x16xf32, #tpu.memory_space<vmem>>, vector<1x8x16xf32>
    %8 = vector.shape_cast %7 : vector<1x8x16xf32> to vector<8x16xf32>
    %c2 = arith.constant 2 : index
    %c0_8 = arith.constant 0 : index
    %c0_9 = arith.constant 0 : index
    %9 = vector.load %arg1[%c2, %c0_8, %c0_9] : memref<4x8x16xf32, #tpu.memory_space<vmem>>, vector<1x8x16xf32>
    %10 = vector.shape_cast %9 : vector<1x8x16xf32> to vector<8x16xf32>
    %c3 = arith.constant 3 : index
    %c0_10 = arith.constant 0 : index
    %c0_11 = arith.constant 0 : index
    %11 = vector.load %arg1[%c3, %c0_10, %c0_11] : memref<4x8x16xf32, #tpu.memory_space<vmem>>, vector<1x8x16xf32>
    %12 = vector.shape_cast %11 : vector<1x8x16xf32> to vector<8x16xf32>
    %13 = arith.truncf %6 : vector<8x16xf32> to vector<8x16xbf16>
    %cst = arith.constant dense<0.000000e+00> : vector<8x128xf32>
    %14 = tpu.matmul %13, %0, %cst {dimension_numbers = #tpu.dot_dimension_numbers<[1], [0], [0], [1], [0, 0, 1, 1], [], []>} : vector<8x16xbf16>, vector<16x128xbf16>, vector<8x128xf32> -> vector<8x128xf32>
    %15 = arith.truncf %8 : vector<8x16xf32> to vector<8x16xbf16>
    %c16 = arith.constant 16 : index
    %c0_12 = arith.constant 0 : index
    %16 = vector.load %arg2[%c16, %c0_12] : memref<152x128xbf16, #tpu.memory_space<vmem>>, vector<16x128xbf16>
    %cst_13 = arith.constant dense<0.000000e+00> : vector<8x128xf32>
    %17 = tpu.matmul %15, %16, %cst_13 {dimension_numbers = #tpu.dot_dimension_numbers<[1], [0], [0], [1], [0, 0, 1, 1], [], []>} : vector<8x16xbf16>, vector<16x128xbf16>, vector<8x128xf32> -> vector<8x128xf32>
    %c0_14 = arith.constant 0 : index
    %c0_15 = arith.constant 0 : index
    %18 = vector.load %arg0[%c0_14, %c0_15] : memref<64x64xf32, #tpu.memory_space<vmem>>, vector<8x64xf32>
    %19 = vector.extract_strided_slice %14 {offsets = [0, 0], sizes = [8, 64], strides = [1, 1]} : vector<8x128xf32> to vector<8x64xf32>
    %20 = arith.addf %18, %19 : vector<8x64xf32>
    %21 = math.tanh %20 : vector<8x64xf32>
    %22 = vector.extract_strided_slice %21 {offsets = [0, 0], sizes = [8, 48], strides = [1, 1]} : vector<8x64xf32> to vector<8x48xf32>
    %cst_16 = arith.constant 5.000000e-01 : f32
    %23 = vector.broadcast %cst_16 : f32 to vector<8x48xf32>
    %24 = arith.mulf %22, %23 : vector<8x48xf32>
    %cst_17 = arith.constant 5.000000e-01 : f32
    %25 = vector.broadcast %cst_17 : f32 to vector<8x48xf32>
    %26 = arith.addf %24, %25 : vector<8x48xf32>
    %27 = vector.extract_strided_slice %21 {offsets = [0, 48], sizes = [8, 16], strides = [1, 1]} : vector<8x64xf32> to vector<8x16xf32>
    %28 = vector.extract_strided_slice %26 {offsets = [0, 16], sizes = [8, 16], strides = [1, 1]} : vector<8x48xf32> to vector<8x16xf32>
    %29 = arith.mulf %28, %10 : vector<8x16xf32>
    %30 = vector.extract_strided_slice %26 {offsets = [0, 0], sizes = [8, 16], strides = [1, 1]} : vector<8x48xf32> to vector<8x16xf32>
    %31 = arith.mulf %30, %27 : vector<8x16xf32>
    %32 = arith.addf %29, %31 : vector<8x16xf32>
    %33 = vector.extract_strided_slice %26 {offsets = [0, 32], sizes = [8, 16], strides = [1, 1]} : vector<8x48xf32> to vector<8x16xf32>
    %34 = math.tanh %32 : vector<8x16xf32>
    %35 = arith.mulf %33, %34 : vector<8x16xf32>
    %36 = arith.truncf %35 : vector<8x16xf32> to vector<8x16xbf16>
    %cst_18 = arith.constant dense<0.000000e+00> : vector<8x128xf32>
    %37 = tpu.matmul %36, %0, %cst_18 {dimension_numbers = #tpu.dot_dimension_numbers<[1], [0], [0], [1], [0, 0, 1, 1], [], []>} : vector<8x16xbf16>, vector<16x128xbf16>, vector<8x128xf32> -> vector<8x128xf32>
    %38 = vector.extract_strided_slice %37 {offsets = [0, 64], sizes = [8, 64], strides = [1, 1]} : vector<8x128xf32> to vector<8x64xf32>
    %39 = arith.addf %38, %4 : vector<8x64xf32>
    %40 = vector.extract_strided_slice %17 {offsets = [0, 0], sizes = [8, 64], strides = [1, 1]} : vector<8x128xf32> to vector<8x64xf32>
    %41 = arith.addf %39, %40 : vector<8x64xf32>
    %42 = math.tanh %41 : vector<8x64xf32>
    %43 = vector.extract_strided_slice %42 {offsets = [0, 0], sizes = [8, 48], strides = [1, 1]} : vector<8x64xf32> to vector<8x48xf32>
    %cst_19 = arith.constant 5.000000e-01 : f32
    %44 = vector.broadcast %cst_19 : f32 to vector<8x48xf32>
    %45 = arith.mulf %43, %44 : vector<8x48xf32>
    %cst_20 = arith.constant 5.000000e-01 : f32
    %46 = vector.broadcast %cst_20 : f32 to vector<8x48xf32>
    %47 = arith.addf %45, %46 : vector<8x48xf32>
    %48 = vector.extract_strided_slice %42 {offsets = [0, 48], sizes = [8, 16], strides = [1, 1]} : vector<8x64xf32> to vector<8x16xf32>
    %49 = vector.extract_strided_slice %47 {offsets = [0, 16], sizes = [8, 16], strides = [1, 1]} : vector<8x48xf32> to vector<8x16xf32>
    %50 = arith.mulf %49, %12 : vector<8x16xf32>
    %51 = vector.extract_strided_slice %47 {offsets = [0, 0], sizes = [8, 16], strides = [1, 1]} : vector<8x48xf32> to vector<8x16xf32>
    %52 = arith.mulf %51, %48 : vector<8x16xf32>
    %53 = arith.addf %50, %52 : vector<8x16xf32>
    %54 = vector.extract_strided_slice %47 {offsets = [0, 32], sizes = [8, 16], strides = [1, 1]} : vector<8x48xf32> to vector<8x16xf32>
    %55 = math.tanh %53 : vector<8x16xf32>
    %56 = arith.mulf %54, %55 : vector<8x16xf32>
    %c16_21 = arith.constant 16 : index
    %c0_22 = arith.constant 0 : index
    %57 = vector.load %arg2[%c16_21, %c0_22] : memref<152x128xbf16, #tpu.memory_space<vmem>>, vector<16x128xbf16>
    %58 = arith.truncf %56 : vector<8x16xf32> to vector<8x16xbf16>
    %cst_23 = arith.constant dense<0.000000e+00> : vector<8x128xf32>
    %59 = tpu.matmul %58, %57, %cst_23 {dimension_numbers = #tpu.dot_dimension_numbers<[1], [0], [0], [1], [0, 0, 1, 1], [], []>} : vector<8x16xbf16>, vector<16x128xbf16>, vector<8x128xf32> -> vector<8x128xf32>
    %60 = vector.extract_strided_slice %59 {offsets = [0, 64], sizes = [8, 8], strides = [1, 1]} : vector<8x128xf32> to vector<8x8xf32>
    %c8 = arith.constant 8 : index
    %c0_24 = arith.constant 0 : index
    %61 = vector.load %arg0[%c8, %c0_24] : memref<64x64xf32, #tpu.memory_space<vmem>>, vector<8x64xf32>
    %62 = vector.extract_strided_slice %37 {offsets = [0, 0], sizes = [8, 64], strides = [1, 1]} : vector<8x128xf32> to vector<8x64xf32>
    %63 = arith.addf %61, %62 : vector<8x64xf32>
    %64 = math.tanh %63 : vector<8x64xf32>
    %65 = vector.extract_strided_slice %64 {offsets = [0, 0], sizes = [8, 48], strides = [1, 1]} : vector<8x64xf32> to vector<8x48xf32>
    %cst_25 = arith.constant 5.000000e-01 : f32
    %66 = vector.broadcast %cst_25 : f32 to vector<8x48xf32>
    %67 = arith.mulf %65, %66 : vector<8x48xf32>
    %cst_26 = arith.constant 5.000000e-01 : f32
    %68 = vector.broadcast %cst_26 : f32 to vector<8x48xf32>
    %69 = arith.addf %67, %68 : vector<8x48xf32>
    %70 = vector.extract_strided_slice %64 {offsets = [0, 48], sizes = [8, 16], strides = [1, 1]} : vector<8x64xf32> to vector<8x16xf32>
    %71 = vector.extract_strided_slice %69 {offsets = [0, 16], sizes = [8, 16], strides = [1, 1]} : vector<8x48xf32> to vector<8x16xf32>
    %72 = arith.mulf %71, %32 : vector<8x16xf32>
    %73 = vector.extract_strided_slice %69 {offsets = [0, 0], sizes = [8, 16], strides = [1, 1]} : vector<8x48xf32> to vector<8x16xf32>
    %74 = arith.mulf %73, %70 : vector<8x16xf32>
    %75 = arith.addf %72, %74 : vector<8x16xf32>
    %76 = vector.extract_strided_slice %69 {offsets = [0, 32], sizes = [8, 16], strides = [1, 1]} : vector<8x48xf32> to vector<8x16xf32>
    %77 = math.tanh %75 : vector<8x16xf32>
    %78 = arith.mulf %76, %77 : vector<8x16xf32>
    %79 = arith.truncf %78 : vector<8x16xf32> to vector<8x16xbf16>
    %cst_27 = arith.constant dense<0.000000e+00> : vector<8x128xf32>
    %80 = tpu.matmul %79, %0, %cst_27 {dimension_numbers = #tpu.dot_dimension_numbers<[1], [0], [0], [1], [0, 0, 1, 1], [], []>} : vector<8x16xbf16>, vector<16x128xbf16>, vector<8x128xf32> -> vector<8x128xf32>
    %81 = vector.extract_strided_slice %80 {offsets = [0, 64], sizes = [8, 64], strides = [1, 1]} : vector<8x128xf32> to vector<8x64xf32>
    %82 = arith.addf %81, %4 : vector<8x64xf32>
    %83 = vector.extract_strided_slice %59 {offsets = [0, 0], sizes = [8, 64], strides = [1, 1]} : vector<8x128xf32> to vector<8x64xf32>
    %84 = arith.addf %82, %83 : vector<8x64xf32>
    %85 = math.tanh %84 : vector<8x64xf32>
    %86 = vector.extract_strided_slice %85 {offsets = [0, 0], sizes = [8, 48], strides = [1, 1]} : vector<8x64xf32> to vector<8x48xf32>
    %cst_28 = arith.constant 5.000000e-01 : f32
    %87 = vector.broadcast %cst_28 : f32 to vector<8x48xf32>
    %88 = arith.mulf %86, %87 : vector<8x48xf32>
    %cst_29 = arith.constant 5.000000e-01 : f32
    %89 = vector.broadcast %cst_29 : f32 to vector<8x48xf32>
    %90 = arith.addf %88, %89 : vector<8x48xf32>
    %91 = vector.extract_strided_slice %85 {offsets = [0, 48], sizes = [8, 16], strides = [1, 1]} : vector<8x64xf32> to vector<8x16xf32>
    %92 = vector.extract_strided_slice %90 {offsets = [0, 16], sizes = [8, 16], strides = [1, 1]} : vector<8x48xf32> to vector<8x16xf32>
    %93 = arith.mulf %92, %53 : vector<8x16xf32>
    %94 = vector.extract_strided_slice %90 {offsets = [0, 0], sizes = [8, 16], strides = [1, 1]} : vector<8x48xf32> to vector<8x16xf32>
    %95 = arith.mulf %94, %91 : vector<8x16xf32>
    %96 = arith.addf %93, %95 : vector<8x16xf32>
    %97 = vector.extract_strided_slice %90 {offsets = [0, 32], sizes = [8, 16], strides = [1, 1]} : vector<8x48xf32> to vector<8x16xf32>
    %98 = math.tanh %96 : vector<8x16xf32>
    %99 = arith.mulf %97, %98 : vector<8x16xf32>
    %c32 = arith.constant 32 : index
    %c0_30 = arith.constant 0 : index
    %100 = vector.load %arg2[%c32, %c0_30] : memref<152x128xbf16, #tpu.memory_space<vmem>>, vector<16x128xbf16>
    %101 = arith.truncf %99 : vector<8x16xf32> to vector<8x16xbf16>
    %cst_31 = arith.constant dense<0.000000e+00> : vector<8x128xf32>
    %102 = tpu.matmul %101, %100, %cst_31 {dimension_numbers = #tpu.dot_dimension_numbers<[1], [0], [0], [1], [0, 0, 1, 1], [], []>} : vector<8x16xbf16>, vector<16x128xbf16>, vector<8x128xf32> -> vector<8x128xf32>
    %103 = vector.extract_strided_slice %102 {offsets = [0, 64], sizes = [8, 8], strides = [1, 1]} : vector<8x128xf32> to vector<8x8xf32>
    %104 = arith.addf %60, %103 : vector<8x8xf32>
    %c16_32 = arith.constant 16 : index
    %c0_33 = arith.constant 0 : index
    %105 = vector.load %arg0[%c16_32, %c0_33] : memref<64x64xf32, #tpu.memory_space<vmem>>, vector<8x64xf32>
    %106 = vector.extract_strided_slice %80 {offsets = [0, 0], sizes = [8, 64], strides = [1, 1]} : vector<8x128xf32> to vector<8x64xf32>
    %107 = arith.addf %105, %106 : vector<8x64xf32>
    %108 = math.tanh %107 : vector<8x64xf32>
    %109 = vector.extract_strided_slice %108 {offsets = [0, 0], sizes = [8, 48], strides = [1, 1]} : vector<8x64xf32> to vector<8x48xf32>
    %cst_34 = arith.constant 5.000000e-01 : f32
    %110 = vector.broadcast %cst_34 : f32 to vector<8x48xf32>
    %111 = arith.mulf %109, %110 : vector<8x48xf32>
    %cst_35 = arith.constant 5.000000e-01 : f32
    %112 = vector.broadcast %cst_35 : f32 to vector<8x48xf32>
    %113 = arith.addf %111, %112 : vector<8x48xf32>
    %114 = vector.extract_strided_slice %108 {offsets = [0, 48], sizes = [8, 16], strides = [1, 1]} : vector<8x64xf32> to vector<8x16xf32>
    %115 = vector.extract_strided_slice %113 {offsets = [0, 16], sizes = [8, 16], strides = [1, 1]} : vector<8x48xf32> to vector<8x16xf32>
    %116 = arith.mulf %115, %75 : vector<8x16xf32>
    %117 = vector.extract_strided_slice %113 {offsets = [0, 0], sizes = [8, 16], strides = [1, 1]} : vector<8x48xf32> to vector<8x16xf32>
    %118 = arith.mulf %117, %114 : vector<8x16xf32>
    %119 = arith.addf %116, %118 : vector<8x16xf32>
    %120 = vector.extract_strided_slice %113 {offsets = [0, 32], sizes = [8, 16], strides = [1, 1]} : vector<8x48xf32> to vector<8x16xf32>
    %121 = math.tanh %119 : vector<8x16xf32>
    %122 = arith.mulf %120, %121 : vector<8x16xf32>
    %123 = arith.truncf %122 : vector<8x16xf32> to vector<8x16xbf16>
    %cst_36 = arith.constant dense<0.000000e+00> : vector<8x128xf32>
    %124 = tpu.matmul %123, %0, %cst_36 {dimension_numbers = #tpu.dot_dimension_numbers<[1], [0], [0], [1], [0, 0, 1, 1], [], []>} : vector<8x16xbf16>, vector<16x128xbf16>, vector<8x128xf32> -> vector<8x128xf32>
    %125 = vector.extract_strided_slice %124 {offsets = [0, 64], sizes = [8, 64], strides = [1, 1]} : vector<8x128xf32> to vector<8x64xf32>
    %126 = arith.addf %125, %4 : vector<8x64xf32>
    %127 = vector.extract_strided_slice %102 {offsets = [0, 0], sizes = [8, 64], strides = [1, 1]} : vector<8x128xf32> to vector<8x64xf32>
    %128 = arith.addf %126, %127 : vector<8x64xf32>
    %129 = math.tanh %128 : vector<8x64xf32>
    %130 = vector.extract_strided_slice %129 {offsets = [0, 0], sizes = [8, 48], strides = [1, 1]} : vector<8x64xf32> to vector<8x48xf32>
    %cst_37 = arith.constant 5.000000e-01 : f32
    %131 = vector.broadcast %cst_37 : f32 to vector<8x48xf32>
    %132 = arith.mulf %130, %131 : vector<8x48xf32>
    %cst_38 = arith.constant 5.000000e-01 : f32
    %133 = vector.broadcast %cst_38 : f32 to vector<8x48xf32>
    %134 = arith.addf %132, %133 : vector<8x48xf32>
    %135 = vector.extract_strided_slice %129 {offsets = [0, 48], sizes = [8, 16], strides = [1, 1]} : vector<8x64xf32> to vector<8x16xf32>
    %136 = vector.extract_strided_slice %134 {offsets = [0, 16], sizes = [8, 16], strides = [1, 1]} : vector<8x48xf32> to vector<8x16xf32>
    %137 = arith.mulf %136, %96 : vector<8x16xf32>
    %138 = vector.extract_strided_slice %134 {offsets = [0, 0], sizes = [8, 16], strides = [1, 1]} : vector<8x48xf32> to vector<8x16xf32>
    %139 = arith.mulf %138, %135 : vector<8x16xf32>
    %140 = arith.addf %137, %139 : vector<8x16xf32>
    %141 = vector.extract_strided_slice %134 {offsets = [0, 32], sizes = [8, 16], strides = [1, 1]} : vector<8x48xf32> to vector<8x16xf32>
    %142 = math.tanh %140 : vector<8x16xf32>
    %143 = arith.mulf %141, %142 : vector<8x16xf32>
    %c48 = arith.constant 48 : index
    %c0_39 = arith.constant 0 : index
    %144 = vector.load %arg2[%c48, %c0_39] : memref<152x128xbf16, #tpu.memory_space<vmem>>, vector<16x128xbf16>
    %145 = arith.truncf %143 : vector<8x16xf32> to vector<8x16xbf16>
    %cst_40 = arith.constant dense<0.000000e+00> : vector<8x128xf32>
    %146 = tpu.matmul %145, %144, %cst_40 {dimension_numbers = #tpu.dot_dimension_numbers<[1], [0], [0], [1], [0, 0, 1, 1], [], []>} : vector<8x16xbf16>, vector<16x128xbf16>, vector<8x128xf32> -> vector<8x128xf32>
    %147 = vector.extract_strided_slice %146 {offsets = [0, 64], sizes = [8, 8], strides = [1, 1]} : vector<8x128xf32> to vector<8x8xf32>
    %148 = arith.addf %104, %147 : vector<8x8xf32>
    %c24 = arith.constant 24 : index
    %c0_41 = arith.constant 0 : index
    %149 = vector.load %arg0[%c24, %c0_41] : memref<64x64xf32, #tpu.memory_space<vmem>>, vector<8x64xf32>
    %150 = vector.extract_strided_slice %124 {offsets = [0, 0], sizes = [8, 64], strides = [1, 1]} : vector<8x128xf32> to vector<8x64xf32>
    %151 = arith.addf %149, %150 : vector<8x64xf32>
    %152 = math.tanh %151 : vector<8x64xf32>
    %153 = vector.extract_strided_slice %152 {offsets = [0, 0], sizes = [8, 48], strides = [1, 1]} : vector<8x64xf32> to vector<8x48xf32>
    %cst_42 = arith.constant 5.000000e-01 : f32
    %154 = vector.broadcast %cst_42 : f32 to vector<8x48xf32>
    %155 = arith.mulf %153, %154 : vector<8x48xf32>
    %cst_43 = arith.constant 5.000000e-01 : f32
    %156 = vector.broadcast %cst_43 : f32 to vector<8x48xf32>
    %157 = arith.addf %155, %156 : vector<8x48xf32>
    %158 = vector.extract_strided_slice %152 {offsets = [0, 48], sizes = [8, 16], strides = [1, 1]} : vector<8x64xf32> to vector<8x16xf32>
    %159 = vector.extract_strided_slice %157 {offsets = [0, 16], sizes = [8, 16], strides = [1, 1]} : vector<8x48xf32> to vector<8x16xf32>
    %160 = arith.mulf %159, %119 : vector<8x16xf32>
    %161 = vector.extract_strided_slice %157 {offsets = [0, 0], sizes = [8, 16], strides = [1, 1]} : vector<8x48xf32> to vector<8x16xf32>
    %162 = arith.mulf %161, %158 : vector<8x16xf32>
    %163 = arith.addf %160, %162 : vector<8x16xf32>
    %164 = vector.extract_strided_slice %157 {offsets = [0, 32], sizes = [8, 16], strides = [1, 1]} : vector<8x48xf32> to vector<8x16xf32>
    %165 = math.tanh %163 : vector<8x16xf32>
    %166 = arith.mulf %164, %165 : vector<8x16xf32>
    %167 = arith.truncf %166 : vector<8x16xf32> to vector<8x16xbf16>
    %cst_44 = arith.constant dense<0.000000e+00> : vector<8x128xf32>
    %168 = tpu.matmul %167, %0, %cst_44 {dimension_numbers = #tpu.dot_dimension_numbers<[1], [0], [0], [1], [0, 0, 1, 1], [], []>} : vector<8x16xbf16>, vector<16x128xbf16>, vector<8x128xf32> -> vector<8x128xf32>
    %169 = vector.extract_strided_slice %168 {offsets = [0, 64], sizes = [8, 64], strides = [1, 1]} : vector<8x128xf32> to vector<8x64xf32>
    %170 = arith.addf %169, %4 : vector<8x64xf32>
    %171 = vector.extract_strided_slice %146 {offsets = [0, 0], sizes = [8, 64], strides = [1, 1]} : vector<8x128xf32> to vector<8x64xf32>
    %172 = arith.addf %170, %171 : vector<8x64xf32>
    %173 = math.tanh %172 : vector<8x64xf32>
    %174 = vector.extract_strided_slice %173 {offsets = [0, 0], sizes = [8, 48], strides = [1, 1]} : vector<8x64xf32> to vector<8x48xf32>
    %cst_45 = arith.constant 5.000000e-01 : f32
    %175 = vector.broadcast %cst_45 : f32 to vector<8x48xf32>
    %176 = arith.mulf %174, %175 : vector<8x48xf32>
    %cst_46 = arith.constant 5.000000e-01 : f32
    %177 = vector.broadcast %cst_46 : f32 to vector<8x48xf32>
    %178 = arith.addf %176, %177 : vector<8x48xf32>
    %179 = vector.extract_strided_slice %173 {offsets = [0, 48], sizes = [8, 16], strides = [1, 1]} : vector<8x64xf32> to vector<8x16xf32>
    %180 = vector.extract_strided_slice %178 {offsets = [0, 16], sizes = [8, 16], strides = [1, 1]} : vector<8x48xf32> to vector<8x16xf32>
    %181 = arith.mulf %180, %140 : vector<8x16xf32>
    %182 = vector.extract_strided_slice %178 {offsets = [0, 0], sizes = [8, 16], strides = [1, 1]} : vector<8x48xf32> to vector<8x16xf32>
    %183 = arith.mulf %182, %179 : vector<8x16xf32>
    %184 = arith.addf %181, %183 : vector<8x16xf32>
    %185 = vector.extract_strided_slice %178 {offsets = [0, 32], sizes = [8, 16], strides = [1, 1]} : vector<8x48xf32> to vector<8x16xf32>
    %186 = math.tanh %184 : vector<8x16xf32>
    %187 = arith.mulf %185, %186 : vector<8x16xf32>
    %c64 = arith.constant 64 : index
    %c0_47 = arith.constant 0 : index
    %188 = vector.load %arg2[%c64, %c0_47] : memref<152x128xbf16, #tpu.memory_space<vmem>>, vector<16x128xbf16>
    %189 = arith.truncf %187 : vector<8x16xf32> to vector<8x16xbf16>
    %cst_48 = arith.constant dense<0.000000e+00> : vector<8x128xf32>
    %190 = tpu.matmul %189, %188, %cst_48 {dimension_numbers = #tpu.dot_dimension_numbers<[1], [0], [0], [1], [0, 0, 1, 1], [], []>} : vector<8x16xbf16>, vector<16x128xbf16>, vector<8x128xf32> -> vector<8x128xf32>
    %191 = vector.extract_strided_slice %190 {offsets = [0, 64], sizes = [8, 8], strides = [1, 1]} : vector<8x128xf32> to vector<8x8xf32>
    %192 = arith.addf %148, %191 : vector<8x8xf32>
    %c32_49 = arith.constant 32 : index
    %c0_50 = arith.constant 0 : index
    %193 = vector.load %arg0[%c32_49, %c0_50] : memref<64x64xf32, #tpu.memory_space<vmem>>, vector<8x64xf32>
    %194 = vector.extract_strided_slice %168 {offsets = [0, 0], sizes = [8, 64], strides = [1, 1]} : vector<8x128xf32> to vector<8x64xf32>
    %195 = arith.addf %193, %194 : vector<8x64xf32>
    %196 = math.tanh %195 : vector<8x64xf32>
    %197 = vector.extract_strided_slice %196 {offsets = [0, 0], sizes = [8, 48], strides = [1, 1]} : vector<8x64xf32> to vector<8x48xf32>
    %cst_51 = arith.constant 5.000000e-01 : f32
    %198 = vector.broadcast %cst_51 : f32 to vector<8x48xf32>
    %199 = arith.mulf %197, %198 : vector<8x48xf32>
    %cst_52 = arith.constant 5.000000e-01 : f32
    %200 = vector.broadcast %cst_52 : f32 to vector<8x48xf32>
    %201 = arith.addf %199, %200 : vector<8x48xf32>
    %202 = vector.extract_strided_slice %196 {offsets = [0, 48], sizes = [8, 16], strides = [1, 1]} : vector<8x64xf32> to vector<8x16xf32>
    %203 = vector.extract_strided_slice %201 {offsets = [0, 16], sizes = [8, 16], strides = [1, 1]} : vector<8x48xf32> to vector<8x16xf32>
    %204 = arith.mulf %203, %163 : vector<8x16xf32>
    %205 = vector.extract_strided_slice %201 {offsets = [0, 0], sizes = [8, 16], strides = [1, 1]} : vector<8x48xf32> to vector<8x16xf32>
    %206 = arith.mulf %205, %202 : vector<8x16xf32>
    %207 = arith.addf %204, %206 : vector<8x16xf32>
    %208 = vector.extract_strided_slice %201 {offsets = [0, 32], sizes = [8, 16], strides = [1, 1]} : vector<8x48xf32> to vector<8x16xf32>
    %209 = math.tanh %207 : vector<8x16xf32>
    %210 = arith.mulf %208, %209 : vector<8x16xf32>
    %211 = arith.truncf %210 : vector<8x16xf32> to vector<8x16xbf16>
    %cst_53 = arith.constant dense<0.000000e+00> : vector<8x128xf32>
    %212 = tpu.matmul %211, %0, %cst_53 {dimension_numbers = #tpu.dot_dimension_numbers<[1], [0], [0], [1], [0, 0, 1, 1], [], []>} : vector<8x16xbf16>, vector<16x128xbf16>, vector<8x128xf32> -> vector<8x128xf32>
    %213 = vector.extract_strided_slice %212 {offsets = [0, 64], sizes = [8, 64], strides = [1, 1]} : vector<8x128xf32> to vector<8x64xf32>
    %214 = arith.addf %213, %4 : vector<8x64xf32>
    %215 = vector.extract_strided_slice %190 {offsets = [0, 0], sizes = [8, 64], strides = [1, 1]} : vector<8x128xf32> to vector<8x64xf32>
    %216 = arith.addf %214, %215 : vector<8x64xf32>
    %217 = math.tanh %216 : vector<8x64xf32>
    %218 = vector.extract_strided_slice %217 {offsets = [0, 0], sizes = [8, 48], strides = [1, 1]} : vector<8x64xf32> to vector<8x48xf32>
    %cst_54 = arith.constant 5.000000e-01 : f32
    %219 = vector.broadcast %cst_54 : f32 to vector<8x48xf32>
    %220 = arith.mulf %218, %219 : vector<8x48xf32>
    %cst_55 = arith.constant 5.000000e-01 : f32
    %221 = vector.broadcast %cst_55 : f32 to vector<8x48xf32>
    %222 = arith.addf %220, %221 : vector<8x48xf32>
    %223 = vector.extract_strided_slice %217 {offsets = [0, 48], sizes = [8, 16], strides = [1, 1]} : vector<8x64xf32> to vector<8x16xf32>
    %224 = vector.extract_strided_slice %222 {offsets = [0, 16], sizes = [8, 16], strides = [1, 1]} : vector<8x48xf32> to vector<8x16xf32>
    %225 = arith.mulf %224, %184 : vector<8x16xf32>
    %226 = vector.extract_strided_slice %222 {offsets = [0, 0], sizes = [8, 16], strides = [1, 1]} : vector<8x48xf32> to vector<8x16xf32>
    %227 = arith.mulf %226, %223 : vector<8x16xf32>
    %228 = arith.addf %225, %227 : vector<8x16xf32>
    %229 = vector.extract_strided_slice %222 {offsets = [0, 32], sizes = [8, 16], strides = [1, 1]} : vector<8x48xf32> to vector<8x16xf32>
    %230 = math.tanh %228 : vector<8x16xf32>
    %231 = arith.mulf %229, %230 : vector<8x16xf32>
    %c80 = arith.constant 80 : index
    %c0_56 = arith.constant 0 : index
    %232 = vector.load %arg2[%c80, %c0_56] : memref<152x128xbf16, #tpu.memory_space<vmem>>, vector<16x128xbf16>
    %233 = arith.truncf %231 : vector<8x16xf32> to vector<8x16xbf16>
    %cst_57 = arith.constant dense<0.000000e+00> : vector<8x128xf32>
    %234 = tpu.matmul %233, %232, %cst_57 {dimension_numbers = #tpu.dot_dimension_numbers<[1], [0], [0], [1], [0, 0, 1, 1], [], []>} : vector<8x16xbf16>, vector<16x128xbf16>, vector<8x128xf32> -> vector<8x128xf32>
    %235 = vector.extract_strided_slice %234 {offsets = [0, 64], sizes = [8, 8], strides = [1, 1]} : vector<8x128xf32> to vector<8x8xf32>
    %236 = arith.addf %192, %235 : vector<8x8xf32>
    %c40 = arith.constant 40 : index
    %c0_58 = arith.constant 0 : index
    %237 = vector.load %arg0[%c40, %c0_58] : memref<64x64xf32, #tpu.memory_space<vmem>>, vector<8x64xf32>
    %238 = vector.extract_strided_slice %212 {offsets = [0, 0], sizes = [8, 64], strides = [1, 1]} : vector<8x128xf32> to vector<8x64xf32>
    %239 = arith.addf %237, %238 : vector<8x64xf32>
    %240 = math.tanh %239 : vector<8x64xf32>
    %241 = vector.extract_strided_slice %240 {offsets = [0, 0], sizes = [8, 48], strides = [1, 1]} : vector<8x64xf32> to vector<8x48xf32>
    %cst_59 = arith.constant 5.000000e-01 : f32
    %242 = vector.broadcast %cst_59 : f32 to vector<8x48xf32>
    %243 = arith.mulf %241, %242 : vector<8x48xf32>
    %cst_60 = arith.constant 5.000000e-01 : f32
    %244 = vector.broadcast %cst_60 : f32 to vector<8x48xf32>
    %245 = arith.addf %243, %244 : vector<8x48xf32>
    %246 = vector.extract_strided_slice %240 {offsets = [0, 48], sizes = [8, 16], strides = [1, 1]} : vector<8x64xf32> to vector<8x16xf32>
    %247 = vector.extract_strided_slice %245 {offsets = [0, 16], sizes = [8, 16], strides = [1, 1]} : vector<8x48xf32> to vector<8x16xf32>
    %248 = arith.mulf %247, %207 : vector<8x16xf32>
    %249 = vector.extract_strided_slice %245 {offsets = [0, 0], sizes = [8, 16], strides = [1, 1]} : vector<8x48xf32> to vector<8x16xf32>
    %250 = arith.mulf %249, %246 : vector<8x16xf32>
    %251 = arith.addf %248, %250 : vector<8x16xf32>
    %252 = vector.extract_strided_slice %245 {offsets = [0, 32], sizes = [8, 16], strides = [1, 1]} : vector<8x48xf32> to vector<8x16xf32>
    %253 = math.tanh %251 : vector<8x16xf32>
    %254 = arith.mulf %252, %253 : vector<8x16xf32>
    %255 = arith.truncf %254 : vector<8x16xf32> to vector<8x16xbf16>
    %cst_61 = arith.constant dense<0.000000e+00> : vector<8x128xf32>
    %256 = tpu.matmul %255, %0, %cst_61 {dimension_numbers = #tpu.dot_dimension_numbers<[1], [0], [0], [1], [0, 0, 1, 1], [], []>} : vector<8x16xbf16>, vector<16x128xbf16>, vector<8x128xf32> -> vector<8x128xf32>
    %257 = vector.extract_strided_slice %256 {offsets = [0, 64], sizes = [8, 64], strides = [1, 1]} : vector<8x128xf32> to vector<8x64xf32>
    %258 = arith.addf %257, %4 : vector<8x64xf32>
    %259 = vector.extract_strided_slice %234 {offsets = [0, 0], sizes = [8, 64], strides = [1, 1]} : vector<8x128xf32> to vector<8x64xf32>
    %260 = arith.addf %258, %259 : vector<8x64xf32>
    %261 = math.tanh %260 : vector<8x64xf32>
    %262 = vector.extract_strided_slice %261 {offsets = [0, 0], sizes = [8, 48], strides = [1, 1]} : vector<8x64xf32> to vector<8x48xf32>
    %cst_62 = arith.constant 5.000000e-01 : f32
    %263 = vector.broadcast %cst_62 : f32 to vector<8x48xf32>
    %264 = arith.mulf %262, %263 : vector<8x48xf32>
    %cst_63 = arith.constant 5.000000e-01 : f32
    %265 = vector.broadcast %cst_63 : f32 to vector<8x48xf32>
    %266 = arith.addf %264, %265 : vector<8x48xf32>
    %267 = vector.extract_strided_slice %261 {offsets = [0, 48], sizes = [8, 16], strides = [1, 1]} : vector<8x64xf32> to vector<8x16xf32>
    %268 = vector.extract_strided_slice %266 {offsets = [0, 16], sizes = [8, 16], strides = [1, 1]} : vector<8x48xf32> to vector<8x16xf32>
    %269 = arith.mulf %268, %228 : vector<8x16xf32>
    %270 = vector.extract_strided_slice %266 {offsets = [0, 0], sizes = [8, 16], strides = [1, 1]} : vector<8x48xf32> to vector<8x16xf32>
    %271 = arith.mulf %270, %267 : vector<8x16xf32>
    %272 = arith.addf %269, %271 : vector<8x16xf32>
    %273 = vector.extract_strided_slice %266 {offsets = [0, 32], sizes = [8, 16], strides = [1, 1]} : vector<8x48xf32> to vector<8x16xf32>
    %274 = math.tanh %272 : vector<8x16xf32>
    %275 = arith.mulf %273, %274 : vector<8x16xf32>
    %c96 = arith.constant 96 : index
    %c0_64 = arith.constant 0 : index
    %276 = vector.load %arg2[%c96, %c0_64] : memref<152x128xbf16, #tpu.memory_space<vmem>>, vector<16x128xbf16>
    %277 = arith.truncf %275 : vector<8x16xf32> to vector<8x16xbf16>
    %cst_65 = arith.constant dense<0.000000e+00> : vector<8x128xf32>
    %278 = tpu.matmul %277, %276, %cst_65 {dimension_numbers = #tpu.dot_dimension_numbers<[1], [0], [0], [1], [0, 0, 1, 1], [], []>} : vector<8x16xbf16>, vector<16x128xbf16>, vector<8x128xf32> -> vector<8x128xf32>
    %279 = vector.extract_strided_slice %278 {offsets = [0, 64], sizes = [8, 8], strides = [1, 1]} : vector<8x128xf32> to vector<8x8xf32>
    %280 = arith.addf %236, %279 : vector<8x8xf32>
    %c48_66 = arith.constant 48 : index
    %c0_67 = arith.constant 0 : index
    %281 = vector.load %arg0[%c48_66, %c0_67] : memref<64x64xf32, #tpu.memory_space<vmem>>, vector<8x64xf32>
    %282 = vector.extract_strided_slice %256 {offsets = [0, 0], sizes = [8, 64], strides = [1, 1]} : vector<8x128xf32> to vector<8x64xf32>
    %283 = arith.addf %281, %282 : vector<8x64xf32>
    %284 = math.tanh %283 : vector<8x64xf32>
    %285 = vector.extract_strided_slice %284 {offsets = [0, 0], sizes = [8, 48], strides = [1, 1]} : vector<8x64xf32> to vector<8x48xf32>
    %cst_68 = arith.constant 5.000000e-01 : f32
    %286 = vector.broadcast %cst_68 : f32 to vector<8x48xf32>
    %287 = arith.mulf %285, %286 : vector<8x48xf32>
    %cst_69 = arith.constant 5.000000e-01 : f32
    %288 = vector.broadcast %cst_69 : f32 to vector<8x48xf32>
    %289 = arith.addf %287, %288 : vector<8x48xf32>
    %290 = vector.extract_strided_slice %284 {offsets = [0, 48], sizes = [8, 16], strides = [1, 1]} : vector<8x64xf32> to vector<8x16xf32>
    %291 = vector.extract_strided_slice %289 {offsets = [0, 16], sizes = [8, 16], strides = [1, 1]} : vector<8x48xf32> to vector<8x16xf32>
    %292 = arith.mulf %291, %251 : vector<8x16xf32>
    %293 = vector.extract_strided_slice %289 {offsets = [0, 0], sizes = [8, 16], strides = [1, 1]} : vector<8x48xf32> to vector<8x16xf32>
    %294 = arith.mulf %293, %290 : vector<8x16xf32>
    %295 = arith.addf %292, %294 : vector<8x16xf32>
    %296 = vector.extract_strided_slice %289 {offsets = [0, 32], sizes = [8, 16], strides = [1, 1]} : vector<8x48xf32> to vector<8x16xf32>
    %297 = math.tanh %295 : vector<8x16xf32>
    %298 = arith.mulf %296, %297 : vector<8x16xf32>
    %299 = arith.truncf %298 : vector<8x16xf32> to vector<8x16xbf16>
    %cst_70 = arith.constant dense<0.000000e+00> : vector<8x128xf32>
    %300 = tpu.matmul %299, %0, %cst_70 {dimension_numbers = #tpu.dot_dimension_numbers<[1], [0], [0], [1], [0, 0, 1, 1], [], []>} : vector<8x16xbf16>, vector<16x128xbf16>, vector<8x128xf32> -> vector<8x128xf32>
    %301 = vector.extract_strided_slice %300 {offsets = [0, 64], sizes = [8, 64], strides = [1, 1]} : vector<8x128xf32> to vector<8x64xf32>
    %302 = arith.addf %301, %4 : vector<8x64xf32>
    %303 = vector.extract_strided_slice %278 {offsets = [0, 0], sizes = [8, 64], strides = [1, 1]} : vector<8x128xf32> to vector<8x64xf32>
    %304 = arith.addf %302, %303 : vector<8x64xf32>
    %305 = math.tanh %304 : vector<8x64xf32>
    %306 = vector.extract_strided_slice %305 {offsets = [0, 0], sizes = [8, 48], strides = [1, 1]} : vector<8x64xf32> to vector<8x48xf32>
    %cst_71 = arith.constant 5.000000e-01 : f32
    %307 = vector.broadcast %cst_71 : f32 to vector<8x48xf32>
    %308 = arith.mulf %306, %307 : vector<8x48xf32>
    %cst_72 = arith.constant 5.000000e-01 : f32
    %309 = vector.broadcast %cst_72 : f32 to vector<8x48xf32>
    %310 = arith.addf %308, %309 : vector<8x48xf32>
    %311 = vector.extract_strided_slice %305 {offsets = [0, 48], sizes = [8, 16], strides = [1, 1]} : vector<8x64xf32> to vector<8x16xf32>
    %312 = vector.extract_strided_slice %310 {offsets = [0, 16], sizes = [8, 16], strides = [1, 1]} : vector<8x48xf32> to vector<8x16xf32>
    %313 = arith.mulf %312, %272 : vector<8x16xf32>
    %314 = vector.extract_strided_slice %310 {offsets = [0, 0], sizes = [8, 16], strides = [1, 1]} : vector<8x48xf32> to vector<8x16xf32>
    %315 = arith.mulf %314, %311 : vector<8x16xf32>
    %316 = arith.addf %313, %315 : vector<8x16xf32>
    %317 = vector.extract_strided_slice %310 {offsets = [0, 32], sizes = [8, 16], strides = [1, 1]} : vector<8x48xf32> to vector<8x16xf32>
    %318 = math.tanh %316 : vector<8x16xf32>
    %319 = arith.mulf %317, %318 : vector<8x16xf32>
    %c112 = arith.constant 112 : index
    %c0_73 = arith.constant 0 : index
    %320 = vector.load %arg2[%c112, %c0_73] : memref<152x128xbf16, #tpu.memory_space<vmem>>, vector<16x128xbf16>
    %321 = arith.truncf %319 : vector<8x16xf32> to vector<8x16xbf16>
    %cst_74 = arith.constant dense<0.000000e+00> : vector<8x128xf32>
    %322 = tpu.matmul %321, %320, %cst_74 {dimension_numbers = #tpu.dot_dimension_numbers<[1], [0], [0], [1], [0, 0, 1, 1], [], []>} : vector<8x16xbf16>, vector<16x128xbf16>, vector<8x128xf32> -> vector<8x128xf32>
    %323 = vector.extract_strided_slice %322 {offsets = [0, 64], sizes = [8, 8], strides = [1, 1]} : vector<8x128xf32> to vector<8x8xf32>
    %324 = arith.addf %280, %323 : vector<8x8xf32>
    %c56 = arith.constant 56 : index
    %c0_75 = arith.constant 0 : index
    %325 = vector.load %arg0[%c56, %c0_75] : memref<64x64xf32, #tpu.memory_space<vmem>>, vector<8x64xf32>
    %326 = vector.extract_strided_slice %300 {offsets = [0, 0], sizes = [8, 64], strides = [1, 1]} : vector<8x128xf32> to vector<8x64xf32>
    %327 = arith.addf %325, %326 : vector<8x64xf32>
    %328 = math.tanh %327 : vector<8x64xf32>
    %329 = vector.extract_strided_slice %328 {offsets = [0, 0], sizes = [8, 48], strides = [1, 1]} : vector<8x64xf32> to vector<8x48xf32>
    %cst_76 = arith.constant 5.000000e-01 : f32
    %330 = vector.broadcast %cst_76 : f32 to vector<8x48xf32>
    %331 = arith.mulf %329, %330 : vector<8x48xf32>
    %cst_77 = arith.constant 5.000000e-01 : f32
    %332 = vector.broadcast %cst_77 : f32 to vector<8x48xf32>
    %333 = arith.addf %331, %332 : vector<8x48xf32>
    %334 = vector.extract_strided_slice %328 {offsets = [0, 48], sizes = [8, 16], strides = [1, 1]} : vector<8x64xf32> to vector<8x16xf32>
    %335 = vector.extract_strided_slice %333 {offsets = [0, 16], sizes = [8, 16], strides = [1, 1]} : vector<8x48xf32> to vector<8x16xf32>
    %336 = arith.mulf %335, %295 : vector<8x16xf32>
    %337 = vector.extract_strided_slice %333 {offsets = [0, 0], sizes = [8, 16], strides = [1, 1]} : vector<8x48xf32> to vector<8x16xf32>
    %338 = arith.mulf %337, %334 : vector<8x16xf32>
    %339 = arith.addf %336, %338 : vector<8x16xf32>
    %340 = vector.extract_strided_slice %333 {offsets = [0, 32], sizes = [8, 16], strides = [1, 1]} : vector<8x48xf32> to vector<8x16xf32>
    %341 = math.tanh %339 : vector<8x16xf32>
    %342 = arith.mulf %340, %341 : vector<8x16xf32>
    %343 = arith.truncf %342 : vector<8x16xf32> to vector<8x16xbf16>
    %cst_78 = arith.constant dense<0.000000e+00> : vector<8x128xf32>
    %344 = tpu.matmul %343, %0, %cst_78 {dimension_numbers = #tpu.dot_dimension_numbers<[1], [0], [0], [1], [0, 0, 1, 1], [], []>} : vector<8x16xbf16>, vector<16x128xbf16>, vector<8x128xf32> -> vector<8x128xf32>
    %345 = vector.extract_strided_slice %344 {offsets = [0, 64], sizes = [8, 64], strides = [1, 1]} : vector<8x128xf32> to vector<8x64xf32>
    %346 = arith.addf %345, %4 : vector<8x64xf32>
    %347 = vector.extract_strided_slice %322 {offsets = [0, 0], sizes = [8, 64], strides = [1, 1]} : vector<8x128xf32> to vector<8x64xf32>
    %348 = arith.addf %346, %347 : vector<8x64xf32>
    %349 = math.tanh %348 : vector<8x64xf32>
    %350 = vector.extract_strided_slice %349 {offsets = [0, 0], sizes = [8, 48], strides = [1, 1]} : vector<8x64xf32> to vector<8x48xf32>
    %cst_79 = arith.constant 5.000000e-01 : f32
    %351 = vector.broadcast %cst_79 : f32 to vector<8x48xf32>
    %352 = arith.mulf %350, %351 : vector<8x48xf32>
    %cst_80 = arith.constant 5.000000e-01 : f32
    %353 = vector.broadcast %cst_80 : f32 to vector<8x48xf32>
    %354 = arith.addf %352, %353 : vector<8x48xf32>
    %355 = vector.extract_strided_slice %349 {offsets = [0, 48], sizes = [8, 16], strides = [1, 1]} : vector<8x64xf32> to vector<8x16xf32>
    %356 = vector.extract_strided_slice %354 {offsets = [0, 16], sizes = [8, 16], strides = [1, 1]} : vector<8x48xf32> to vector<8x16xf32>
    %357 = arith.mulf %356, %316 : vector<8x16xf32>
    %358 = vector.extract_strided_slice %354 {offsets = [0, 0], sizes = [8, 16], strides = [1, 1]} : vector<8x48xf32> to vector<8x16xf32>
    %359 = arith.mulf %358, %355 : vector<8x16xf32>
    %360 = arith.addf %357, %359 : vector<8x16xf32>
    %361 = vector.extract_strided_slice %354 {offsets = [0, 32], sizes = [8, 16], strides = [1, 1]} : vector<8x48xf32> to vector<8x16xf32>
    %362 = math.tanh %360 : vector<8x16xf32>
    %363 = arith.mulf %361, %362 : vector<8x16xf32>
    %c128 = arith.constant 128 : index
    %c0_81 = arith.constant 0 : index
    %364 = vector.load %arg2[%c128, %c0_81] : memref<152x128xbf16, #tpu.memory_space<vmem>>, vector<16x128xbf16>
    %365 = arith.truncf %363 : vector<8x16xf32> to vector<8x16xbf16>
    %cst_82 = arith.constant dense<0.000000e+00> : vector<8x128xf32>
    %366 = tpu.matmul %365, %364, %cst_82 {dimension_numbers = #tpu.dot_dimension_numbers<[1], [0], [0], [1], [0, 0, 1, 1], [], []>} : vector<8x16xbf16>, vector<16x128xbf16>, vector<8x128xf32> -> vector<8x128xf32>
    %367 = vector.extract_strided_slice %366 {offsets = [0, 64], sizes = [8, 8], strides = [1, 1]} : vector<8x128xf32> to vector<8x8xf32>
    %368 = arith.addf %324, %367 : vector<8x8xf32>
    %c1_83 = arith.constant 1 : index
    %c0_84 = arith.constant 0 : index
    %369 = vector.load %arg3[%c1_83, %c0_84] : memref<3x128xf32, #tpu.memory_space<vmem>>, vector<1x128xf32>
    %370 = vector.extract_strided_slice %369 {offsets = [0, 0], sizes = [1, 8], strides = [1, 1]} : vector<1x128xf32> to vector<1x8xf32>
    %371 = vector.broadcast %370 : vector<1x8xf32> to vector<8x8xf32>
    %372 = arith.addf %368, %371 : vector<8x8xf32>
    %c0_85 = arith.constant 0 : index
    %c0_86 = arith.constant 0 : index
    %373 = vector.load %arg5[%c0_85, %c0_86] : memref<8x8xf32, #tpu.memory_space<vmem>>, vector<8x8xf32>
    tpu.vector_store %arg5[%c0_85, %c0_86], %372 {strides = array<i32>} : memref<8x8xf32, #tpu.memory_space<vmem>>, vector<8x8xf32>,
    %cst_87 = arith.constant 0.000000e+00 : f32
    %374 = vector.broadcast %cst_87 : f32 to vector<8x8xf32>
    %375 = arith.maximumf %372, %374 : vector<8x8xf32>
    %c144 = arith.constant 144 : index
    %c0_88 = arith.constant 0 : index
    %376 = vector.load %arg2[%c144, %c0_88] : memref<152x128xbf16, #tpu.memory_space<vmem>>, vector<8x128xbf16>
    %377 = arith.truncf %375 : vector<8x8xf32> to vector<8x8xbf16>
    %cst_89 = arith.constant dense<0.000000e+00> : vector<8x128xf32>
    %378 = tpu.matmul %377, %376, %cst_89 {dimension_numbers = #tpu.dot_dimension_numbers<[1], [0], [0], [1], [0, 0, 1, 1], [], []>} : vector<8x8xbf16>, vector<8x128xbf16>, vector<8x128xf32> -> vector<8x128xf32>
    %c2_90 = arith.constant 2 : index
    %c0_91 = arith.constant 0 : index
    %379 = vector.load %arg3[%c2_90, %c0_91] : memref<3x128xf32, #tpu.memory_space<vmem>>, vector<1x128xf32>
    %380 = vector.broadcast %379 : vector<1x128xf32> to vector<8x128xf32>
    %381 = arith.addf %378, %380 : vector<8x128xf32>
    %c0_92 = arith.constant 0 : index
    %c0_93 = arith.constant 0 : index
    %382 = vector.load %arg4[%c0_92, %c0_93] : memref<8x128xf32, #tpu.memory_space<vmem>>, vector<8x128xf32>
    tpu.vector_store %arg4[%c0_92, %c0_93], %381 {strides = array<i32>} : memref<8x128xf32, #tpu.memory_space<vmem>>, vector<8x128xf32>,
    return
  }
}

</mosaic_0001>

<llo_original>
// kernel: lstm_ehr_encoding_forward.1
$region0: #{lstm_ehr_encoding_forward.1}
  #allocation0 [shape = 'u32[]', space=smem, size = 0x4, offset = 0x4, fixed_abs, tag = 'smem constant byte address 0x4 - core index']
  #allocation1 [shape = 'u32[144,128]{1,0:T(1,128)}', space=vmem, size = 0x12000, scoped, tag = 'internal scratch']
  %s0 = inlined_call_operand.vmem [shape: f32[64,64], index: 0, kind: input, shape index: {}]
  %s1 = inlined_call_operand.vmem [shape: f32[4,8,16], index: 1, kind: input, shape index: {}]
  %s2 = inlined_call_operand.vmem [shape: bf16[152,128], index: 2, kind: input, shape index: {}]
  %s3 = inlined_call_operand.vmem [shape: f32[3,128], index: 3, kind: input, shape index: {}]
  %s4 = inlined_call_operand.vmem [shape: f32[8,128], index: 4, kind: output, shape index: {0}]
  %s5 = inlined_call_operand.vmem [shape: f32[8,8], index: 5, kind: output, shape index: {1}]
  %6 = xla_tuple %s4, %s5
  %s7 = sld [smem:[#allocation0]]
  $region34: #{lstm_ehr_encoding_forward.1} parent=0
    _
  %s9 = ssub.s32 1, %s7
  %s10 = scalar_select 0, %s9, %s7
  // Predicated region
  $region2: #{lstm_ehr_encoding_forward.1} parent=0 // pred_check
    _
  $region3: #{lstm_ehr_encoding_forward.1} parent=0 // pred_check_branch
    %12 = sbr.rel (0) target = $region5
  $region4: #{lstm_ehr_encoding_forward.1} parent=0 // pred_region
    _
  $region5: #{lstm_ehr_encoding_forward.1} parent=0 // pred_fallthru
    _
  // Predicated region
  $region6: #{lstm_ehr_encoding_forward.1} parent=0 // pred_check
    _
  $region7: #{lstm_ehr_encoding_forward.1} parent=0 // pred_check_branch
    %14 = sbr.rel (0) target = $region9
  $region8: #{lstm_ehr_encoding_forward.1} parent=0 // pred_region
    _
  $region9: #{lstm_ehr_encoding_forward.1} parent=0 // pred_fallthru
    _
  // Predicated region
  $region10: #{lstm_ehr_encoding_forward.1} parent=0 // pred_check
    _
  $region11: #{lstm_ehr_encoding_forward.1} parent=0 // pred_check_branch
    %16 = sbr.rel (0) target = $region13
  $region12: #{lstm_ehr_encoding_forward.1} parent=0 // pred_region
    _
  $region13: #{lstm_ehr_encoding_forward.1} parent=0 // pred_fallthru
    _
  // Predicated region
  $region14: #{lstm_ehr_encoding_forward.1} parent=0 // pred_check
    _
  $region15: #{lstm_ehr_encoding_forward.1} parent=0 // pred_check_branch
    %18 = sbr.rel (0) target = $region17
  $region16: #{lstm_ehr_encoding_forward.1} parent=0 // pred_region
    _
  $region17: #{lstm_ehr_encoding_forward.1} parent=0 // pred_fallthru
    _
  %v20 = vld [vmem:[%s2] sm:$0xf]
  %v21 = vld [vmem:[%s2 + $0x4] sm:$0xf]
  %v22 = vld [vmem:[%s3] sm:$0x1]
  %v23 = vlaneseq
  %v24 = vshrl.u32 %v23, 7
  %v25 = vsub.s32 0, %v24
  %v26 = vrot.slane %v22, %v25
  %v27 = vld [vmem:[%s1] sm:$0xff]
  %s28 = scalar_lea.vmem %s1, 8
  %v29 = vld [vmem:[%s28] sm:$0xff]
  %s30 = scalar_lea.vmem %s1, 16
  %v31 = vld [vmem:[%s30] sm:$0xff]
  %s32 = scalar_lea.vmem %s1, 24
  %v33 = vld [vmem:[%s32] sm:$0xff]
  %v34 = vpack.c.bf16 %v27, %v27
  %v37 = vunpack.c.l.b16 %v20
  %v38 = vunpack.c.l.b16 %v21
  %v39 = vpack.c.b16 %v38, %v37
  %vm41 = vcmask 130048
  %v43 = vsel %vm41, %v34, 0
  %45 = vmatprep.subr.bf16.mxu0 0
  %46 = vmatpush1.bf16.msra.mxu0 %v39
  %47 = vmatprep.subr.bf16.mxu0 0
  %48 = vmatpush1.bf16.msra.mxu0 0
  %49 = vmatprep.subr.bf16.mxu0 0
  %50 = vmatpush1.bf16.msra.mxu0 0
  %51 = vmatprep.subr.bf16.mxu0 0
  %52 = vmatpush1.bf16.msra.mxu0 0
  %53 = vmatprep.subr.bf16.mxu0 0
  %54 = vmatpush1.bf16.msra.mxu0 0
  %55 = vmatprep.subr.bf16.mxu0 0
  %56 = vmatpush1.bf16.msra.mxu0 0
  %57 = vmatprep.subr.bf16.mxu0 0
  %58 = vmatpush1.bf16.msra.mxu0 0
  %59 = vmatprep.subr.bf16.mxu0 0
  %60 = vmatpush1.bf16.msra.mxu0 0
  %61 = vmatprep.subr.bf16.mxu0 0
  %62 = vmatpush1.bf16.msra.mxu0 0
  %63 = vmatprep.subr.bf16.mxu0 0
  %64 = vmatpush1.bf16.msra.mxu0 0
  %65 = vmatprep.subr.bf16.mxu0 0
  %66 = vmatpush1.bf16.msra.mxu0 0
  %67 = vmatprep.subr.bf16.mxu0 0
  %68 = vmatpush1.bf16.msra.mxu0 0
  %69 = vmatprep.subr.bf16.mxu0 0
  %70 = vmatpush1.bf16.msra.mxu0 0
  %71 = vmatprep.subr.bf16.mxu0 0
  %72 = vmatpush1.bf16.msra.mxu0 0
  %73 = vmatprep.subr.bf16.mxu0 0
  %74 = vmatpush1.bf16.msra.mxu0 0
  %75 = vmatprep.subr.bf16.mxu0 0
  %76 = vmatpush1.bf16.msra.mxu0 0
  %77 = vmatprep.mubr.bf16.mxu0 0
  %78 = vmatmul.mubr.bf16.gmra.mrb[0].mxu0 %v43
  %v79 = vpop.f32.mrb[0].mxu0
  %v80 = vadd.f32 0.0, %v79
  %v81 = vpop.f32.mrb[0].mxu0
  %v82 = vpop.f32.mrb[0].mxu0
  %v83 = vpop.f32.mrb[0].mxu0
  %84 = vdwg.mxu0
  %v85 = vpack.c.bf16 %v29, %v29
  %v86 = vld [vmem:[%s2 + $0x8] sm:$0xf]
  %v87 = vld [vmem:[%s2 + $0xc] sm:$0xf]
  %v90 = vunpack.c.l.b16 %v86
  %v91 = vunpack.c.l.b16 %v87
  %v92 = vpack.c.b16 %v91, %v90
  %v95 = vsel %vm41, %v85, 0
  %97 = vmatprep.subr.bf16.mxu0 0
  %98 = vmatpush1.bf16.msra.mxu0 %v92
  %99 = vmatprep.subr.bf16.mxu0 0
  %100 = vmatpush1.bf16.msra.mxu0 0
  %101 = vmatprep.subr.bf16.mxu0 0
  %102 = vmatpush1.bf16.msra.mxu0 0
  %103 = vmatprep.subr.bf16.mxu0 0
  %104 = vmatpush1.bf16.msra.mxu0 0
  %105 = vmatprep.subr.bf16.mxu0 0
  %106 = vmatpush1.bf16.msra.mxu0 0
  %107 = vmatprep.subr.bf16.mxu0 0
  %108 = vmatpush1.bf16.msra.mxu0 0
  %109 = vmatprep.subr.bf16.mxu0 0
  %110 = vmatpush1.bf16.msra.mxu0 0
  %111 = vmatprep.subr.bf16.mxu0 0
  %112 = vmatpush1.bf16.msra.mxu0 0
  %113 = vmatprep.subr.bf16.mxu0 0
  %114 = vmatpush1.bf16.msra.mxu0 0
  %115 = vmatprep.subr.bf16.mxu0 0
  %116 = vmatpush1.bf16.msra.mxu0 0
  %117 = vmatprep.subr.bf16.mxu0 0
  %118 = vmatpush1.bf16.msra.mxu0 0
  %119 = vmatprep.subr.bf16.mxu0 0
  %120 = vmatpush1.bf16.msra.mxu0 0
  %121 = vmatprep.subr.bf16.mxu0 0
  %122 = vmatpush1.bf16.msra.mxu0 0
  %123 = vmatprep.subr.bf16.mxu0 0
  %124 = vmatpush1.bf16.msra.mxu0 0
  %125 = vmatprep.subr.bf16.mxu0 0
  %126 = vmatpush1.bf16.msra.mxu0 0
  %127 = vmatprep.subr.bf16.mxu0 0
  %128 = vmatpush1.bf16.msra.mxu0 0
  %129 = vmatprep.mubr.bf16.mxu0 0
  %130 = vmatmul.mubr.bf16.gmra.mrb[0].mxu0 %v95
  %v131 = vpop.f32.mrb[0].mxu0
  %v132 = vadd.f32 0.0, %v131
  %v133 = vpop.f32.mrb[0].mxu0
  %v134 = vpop.f32.mrb[0].mxu0
  %v135 = vpop.f32.mrb[0].mxu0
  %136 = vdwg.mxu0
  %v137 = vld [vmem:[%s0] sm:$0xff]
  %v138 = vadd.f32 %v137, %v80
  %v139 = vtanh.pop %v138
  %v140 = vmul.f32 %v139, 0.5
  %v141 = vadd.f32 %v140, 0.5
  %143 = vrot.lane.b32.xlu0 %v31, 16
  %v144 = vpop.permute.xlu0 %143
  %v146 = vmul.f32 %v141, %v144
  %148 = vrot.lane.b32.xlu0 %v139, 80
  %v149 = vpop.permute.xlu0 %148
  %v151 = vmul.f32 %v141, %v149
  %153 = vrot.lane.b32.xlu0 %v151, 16
  %v154 = vpop.permute.xlu0 %153
  %v156 = vadd.f32 %v146, %v154
  %v157 = vtanh.pop %v156
  %159 = vrot.lane.b32.xlu0 %v157, 16
  %v160 = vpop.permute.xlu0 %159
  %v162 = vmul.f32 %v141, %v160
  %v163 = vpack.c.bf16 %v162, %v162
  %165 = vrot.lane.b32.xlu0 %v163, 96
  %v166 = vpop.permute.xlu0 %165
  %v168 = vsel %vm41, %v166, 0
  %170 = vmatprep.subr.bf16.mxu0 0
  %171 = vmatpush1.bf16.msra.mxu0 %v39
  %172 = vmatprep.subr.bf16.mxu0 0
  %173 = vmatpush1.bf16.msra.mxu0 0
  %174 = vmatprep.subr.bf16.mxu0 0
  %175 = vmatpush1.bf16.msra.mxu0 0
  %176 = vmatprep.subr.bf16.mxu0 0
  %177 = vmatpush1.bf16.msra.mxu0 0
  %178 = vmatprep.subr.bf16.mxu0 0
  %179 = vmatpush1.bf16.msra.mxu0 0
  %180 = vmatprep.subr.bf16.mxu0 0
  %181 = vmatpush1.bf16.msra.mxu0 0
  %182 = vmatprep.subr.bf16.mxu0 0
  %183 = vmatpush1.bf16.msra.mxu0 0
  %184 = vmatprep.subr.bf16.mxu0 0
  %185 = vmatpush1.bf16.msra.mxu0 0
  %186 = vmatprep.subr.bf16.mxu0 0
  %187 = vmatpush1.bf16.msra.mxu0 0
  %188 = vmatprep.subr.bf16.mxu0 0
  %189 = vmatpush1.bf16.msra.mxu0 0
  %190 = vmatprep.subr.bf16.mxu0 0
  %191 = vmatpush1.bf16.msra.mxu0 0
  %192 = vmatprep.subr.bf16.mxu0 0
  %193 = vmatpush1.bf16.msra.mxu0 0
  %194 = vmatprep.subr.bf16.mxu0 0
  %195 = vmatpush1.bf16.msra.mxu0 0
  %196 = vmatprep.subr.bf16.mxu0 0
  %197 = vmatpush1.bf16.msra.mxu0 0
  %198 = vmatprep.subr.bf16.mxu0 0
  %199 = vmatpush1.bf16.msra.mxu0 0
  %200 = vmatprep.subr.bf16.mxu0 0
  %201 = vmatpush1.bf16.msra.mxu0 0
  %202 = vmatprep.mubr.bf16.mxu0 0
  %203 = vmatmul.mubr.bf16.gmra.mrb[0].mxu0 %v168
  %v204 = vpop.f32.mrb[0].mxu0
  %v205 = vadd.f32 0.0, %v204
  %v206 = vpop.f32.mrb[0].mxu0
  %v207 = vpop.f32.mrb[0].mxu0
  %v208 = vpop.f32.mrb[0].mxu0
  %209 = vdwg.mxu0
  %211 = vrot.lane.b32.xlu0 %v26, 64
  %v212 = vpop.permute.xlu0 %211
  %v214 = vadd.f32 %v205, %v212
  %216 = vrot.lane.b32.xlu0 %v132, 64
  %v217 = vpop.permute.xlu0 %216
  %v219 = vadd.f32 %v214, %v217
  %v220 = vtanh.pop %v219
  %v221 = vmul.f32 %v220, 0.5
  %v222 = vadd.f32 %v221, 0.5
  %224 = vrot.lane.b32.xlu0 %v33, 80
  %v225 = vpop.permute.xlu0 %224
  %v227 = vmul.f32 %v222, %v225
  %229 = vrot.lane.b32.xlu0 %v220, 80
  %v230 = vpop.permute.xlu0 %229
  %v232 = vmul.f32 %v222, %v230
  %234 = vrot.lane.b32.xlu0 %v232, 16
  %v235 = vpop.permute.xlu0 %234
  %v237 = vadd.f32 %v227, %v235
  %v238 = vtanh.pop %v237
  %240 = vrot.lane.b32.xlu0 %v238, 16
  %v241 = vpop.permute.xlu0 %240
  %v243 = vmul.f32 %v222, %v241
  %v244 = vpack.c.bf16 %v243, %v243
  %246 = vrot.lane.b32.xlu0 %v244, 32
  %v247 = vpop.permute.xlu0 %246
  %v249 = vsel %vm41, %v247, 0
  %251 = vmatprep.subr.bf16.mxu0 0
  %252 = vmatpush1.bf16.msra.mxu0 %v92
  %253 = vmatprep.subr.bf16.mxu0 0
  %254 = vmatpush1.bf16.msra.mxu0 0
  %255 = vmatprep.subr.bf16.mxu0 0
  %256 = vmatpush1.bf16.msra.mxu0 0
  %257 = vmatprep.subr.bf16.mxu0 0
  %258 = vmatpush1.bf16.msra.mxu0 0
  %259 = vmatprep.subr.bf16.mxu0 0
  %260 = vmatpush1.bf16.msra.mxu0 0
  %261 = vmatprep.subr.bf16.mxu0 0
  %262 = vmatpush1.bf16.msra.mxu0 0
  %263 = vmatprep.subr.bf16.mxu0 0
  %264 = vmatpush1.bf16.msra.mxu0 0
  %265 = vmatprep.subr.bf16.mxu0 0
  %266 = vmatpush1.bf16.msra.mxu0 0
  %267 = vmatprep.subr.bf16.mxu0 0
  %268 = vmatpush1.bf16.msra.mxu0 0
  %269 = vmatprep.subr.bf16.mxu0 0
  %270 = vmatpush1.bf16.msra.mxu0 0
  %271 = vmatprep.subr.bf16.mxu0 0
  %272 = vmatpush1.bf16.msra.mxu0 0
  %273 = vmatprep.subr.bf16.mxu0 0
  %274 = vmatpush1.bf16.msra.mxu0 0
  %275 = vmatprep.subr.bf16.mxu0 0
  %276 = vmatpush1.bf16.msra.mxu0 0
  %277 = vmatprep.subr.bf16.mxu0 0
  %278 = vmatpush1.bf16.msra.mxu0 0
  %279 = vmatprep.subr.bf16.mxu0 0
  %280 = vmatpush1.bf16.msra.mxu0 0
  %281 = vmatprep.subr.bf16.mxu0 0
  %282 = vmatpush1.bf16.msra.mxu0 0
  %283 = vmatprep.mubr.bf16.mxu0 0
  %284 = vmatmul.mubr.bf16.gmra.mrb[0].mxu0 %v249
  %v285 = vpop.f32.mrb[0].mxu0
  %v286 = vadd.f32 0.0, %v285
  %v287 = vpop.f32.mrb[0].mxu0
  %v288 = vpop.f32.mrb[0].mxu0
  %v289 = vpop.f32.mrb[0].mxu0
  %290 = vdwg.mxu0
  %v291 = vld [vmem:[%s0 + $0x8] sm:$0xff]
  %v292 = vadd.f32 %v291, %v205
  %v293 = vtanh.pop %v292
  %v294 = vmul.f32 %v293, 0.5
  %v295 = vadd.f32 %v294, 0.5
  %v296 = vmul.f32 %v295, %v156
  %298 = vrot.lane.b32.xlu0 %v293, 80
  %v299 = vpop.permute.xlu0 %298
  %v301 = vmul.f32 %v295, %v299
  %303 = vrot.lane.b32.xlu0 %v301, 16
  %v304 = vpop.permute.xlu0 %303
  %v306 = vadd.f32 %v296, %v304
  %v307 = vtanh.pop %v306
  %309 = vrot.lane.b32.xlu0 %v307, 16
  %v310 = vpop.permute.xlu0 %309
  %v312 = vmul.f32 %v295, %v310
  %v313 = vpack.c.bf16 %v312, %v312
  %315 = vrot.lane.b32.xlu0 %v313, 96
  %v316 = vpop.permute.xlu0 %315
  %v318 = vsel %vm41, %v316, 0
  %320 = vmatprep.subr.bf16.mxu0 0
  %321 = vmatpush1.bf16.msra.mxu0 %v39
  %322 = vmatprep.subr.bf16.mxu0 0
  %323 = vmatpush1.bf16.msra.mxu0 0
  %324 = vmatprep.subr.bf16.mxu0 0
  %325 = vmatpush1.bf16.msra.mxu0 0
  %326 = vmatprep.subr.bf16.mxu0 0
  %327 = vmatpush1.bf16.msra.mxu0 0
  %328 = vmatprep.subr.bf16.mxu0 0
  %329 = vmatpush1.bf16.msra.mxu0 0
  %330 = vmatprep.subr.bf16.mxu0 0
  %331 = vmatpush1.bf16.msra.mxu0 0
  %332 = vmatprep.subr.bf16.mxu0 0
  %333 = vmatpush1.bf16.msra.mxu0 0
  %334 = vmatprep.subr.bf16.mxu0 0
  %335 = vmatpush1.bf16.msra.mxu0 0
  %336 = vmatprep.subr.bf16.mxu0 0
  %337 = vmatpush1.bf16.msra.mxu0 0
  %338 = vmatprep.subr.bf16.mxu0 0
  %339 = vmatpush1.bf16.msra.mxu0 0
  %340 = vmatprep.subr.bf16.mxu0 0
  %341 = vmatpush1.bf16.msra.mxu0 0
  %342 = vmatprep.subr.bf16.mxu0 0
  %343 = vmatpush1.bf16.msra.mxu0 0
  %344 = vmatprep.subr.bf16.mxu0 0
  %345 = vmatpush1.bf16.msra.mxu0 0
  %346 = vmatprep.subr.bf16.mxu0 0
  %347 = vmatpush1.bf16.msra.mxu0 0
  %348 = vmatprep.subr.bf16.mxu0 0
  %349 = vmatpush1.bf16.msra.mxu0 0
  %350 = vmatprep.subr.bf16.mxu0 0
  %351 = vmatpush1.bf16.msra.mxu0 0
  %352 = vmatprep.mubr.bf16.mxu0 0
  %353 = vmatmul.mubr.bf16.gmra.mrb[0].mxu0 %v318
  %v354 = vpop.f32.mrb[0].mxu0
  %v355 = vadd.f32 0.0, %v354
  %v356 = vpop.f32.mrb[0].mxu0
  %v357 = vpop.f32.mrb[0].mxu0
  %v358 = vpop.f32.mrb[0].mxu0
  %359 = vdwg.mxu0
  %v360 = vadd.f32 %v355, %v212
  %362 = vrot.lane.b32.xlu0 %v286, 64
  %v363 = vpop.permute.xlu0 %362
  %v365 = vadd.f32 %v360, %v363
  %v366 = vtanh.pop %v365
  %v367 = vmul.f32 %v366, 0.5
  %v368 = vadd.f32 %v367, 0.5
  %v369 = vmul.f32 %v368, %v237
  %371 = vrot.lane.b32.xlu0 %v366, 80
  %v372 = vpop.permute.xlu0 %371
  %v374 = vmul.f32 %v368, %v372
  %376 = vrot.lane.b32.xlu0 %v374, 16
  %v377 = vpop.permute.xlu0 %376
  %v379 = vadd.f32 %v369, %v377
  %v380 = vtanh.pop %v379
  %382 = vrot.lane.b32.xlu0 %v380, 16
  %v383 = vpop.permute.xlu0 %382
  %v385 = vmul.f32 %v368, %v383
  %v386 = vld [vmem:[%s2 + $0x10] sm:$0xf]
  %v387 = vld [vmem:[%s2 + $0x14] sm:$0xf]
  %v388 = vpack.c.bf16 %v385, %v385
  %390 = vrot.lane.b32.xlu0 %v388, 32
  %v391 = vpop.permute.xlu0 %390
  %v394 = vunpack.c.l.b16 %v386
  %v395 = vunpack.c.l.b16 %v387
  %v396 = vpack.c.b16 %v395, %v394
  %v399 = vsel %vm41, %v391, 0
  %401 = vmatprep.subr.bf16.mxu0 0
  %402 = vmatpush1.bf16.msra.mxu0 %v396
  %403 = vmatprep.subr.bf16.mxu0 0
  %404 = vmatpush1.bf16.msra.mxu0 0
  %405 = vmatprep.subr.bf16.mxu0 0
  %406 = vmatpush1.bf16.msra.mxu0 0
  %407 = vmatprep.subr.bf16.mxu0 0
  %408 = vmatpush1.bf16.msra.mxu0 0
  %409 = vmatprep.subr.bf16.mxu0 0
  %410 = vmatpush1.bf16.msra.mxu0 0
  %411 = vmatprep.subr.bf16.mxu0 0
  %412 = vmatpush1.bf16.msra.mxu0 0
  %413 = vmatprep.subr.bf16.mxu0 0
  %414 = vmatpush1.bf16.msra.mxu0 0
  %415 = vmatprep.subr.bf16.mxu0 0
  %416 = vmatpush1.bf16.msra.mxu0 0
  %417 = vmatprep.subr.bf16.mxu0 0
  %418 = vmatpush1.bf16.msra.mxu0 0
  %419 = vmatprep.subr.bf16.mxu0 0
  %420 = vmatpush1.bf16.msra.mxu0 0
  %421 = vmatprep.subr.bf16.mxu0 0
  %422 = vmatpush1.bf16.msra.mxu0 0
  %423 = vmatprep.subr.bf16.mxu0 0
  %424 = vmatpush1.bf16.msra.mxu0 0
  %425 = vmatprep.subr.bf16.mxu0 0
  %426 = vmatpush1.bf16.msra.mxu0 0
  %427 = vmatprep.subr.bf16.mxu0 0
  %428 = vmatpush1.bf16.msra.mxu0 0
  %429 = vmatprep.subr.bf16.mxu0 0
  %430 = vmatpush1.bf16.msra.mxu0 0
  %431 = vmatprep.subr.bf16.mxu0 0
  %432 = vmatpush1.bf16.msra.mxu0 0
  %433 = vmatprep.mubr.bf16.mxu0 0
  %434 = vmatmul.mubr.bf16.gmra.mrb[0].mxu0 %v399
  %v435 = vpop.f32.mrb[0].mxu0
  %v436 = vadd.f32 0.0, %v435
  %v437 = vpop.f32.mrb[0].mxu0
  %v438 = vpop.f32.mrb[0].mxu0
  %v439 = vpop.f32.mrb[0].mxu0
  %440 = vdwg.mxu0
  %v441 = vadd.f32 %v286, %v436
  %v442 = vld [vmem:[%s0 + $0x10] sm:$0xff]
  %v443 = vadd.f32 %v442, %v355
  %v444 = vtanh.pop %v443
  %v445 = vmul.f32 %v444, 0.5
  %v446 = vadd.f32 %v445, 0.5
  %v447 = vmul.f32 %v446, %v306
  %449 = vrot.lane.b32.xlu0 %v444, 80
  %v450 = vpop.permute.xlu0 %449
  %v452 = vmul.f32 %v446, %v450
  %454 = vrot.lane.b32.xlu0 %v452, 16
  %v455 = vpop.permute.xlu0 %454
  %v457 = vadd.f32 %v447, %v455
  %v458 = vtanh.pop %v457
  %460 = vrot.lane.b32.xlu0 %v458, 16
  %v461 = vpop.permute.xlu0 %460
  %v463 = vmul.f32 %v446, %v461
  %v464 = vpack.c.bf16 %v463, %v463
  %466 = vrot.lane.b32.xlu0 %v464, 96
  %v467 = vpop.permute.xlu0 %466
  %v469 = vsel %vm41, %v467, 0
  %471 = vmatprep.subr.bf16.mxu0 0
  %472 = vmatpush1.bf16.msra.mxu0 %v39
  %473 = vmatprep.subr.bf16.mxu0 0
  %474 = vmatpush1.bf16.msra.mxu0 0
  %475 = vmatprep.subr.bf16.mxu0 0
  %476 = vmatpush1.bf16.msra.mxu0 0
  %477 = vmatprep.subr.bf16.mxu0 0
  %478 = vmatpush1.bf16.msra.mxu0 0
  %479 = vmatprep.subr.bf16.mxu0 0
  %480 = vmatpush1.bf16.msra.mxu0 0
  %481 = vmatprep.subr.bf16.mxu0 0
  %482 = vmatpush1.bf16.msra.mxu0 0
  %483 = vmatprep.subr.bf16.mxu0 0
  %484 = vmatpush1.bf16.msra.mxu0 0
  %485 = vmatprep.subr.bf16.mxu0 0
  %486 = vmatpush1.bf16.msra.mxu0 0
  %487 = vmatprep.subr.bf16.mxu0 0
  %488 = vmatpush1.bf16.msra.mxu0 0
  %489 = vmatprep.subr.bf16.mxu0 0
  %490 = vmatpush1.bf16.msra.mxu0 0
  %491 = vmatprep.subr.bf16.mxu0 0
  %492 = vmatpush1.bf16.msra.mxu0 0
  %493 = vmatprep.subr.bf16.mxu0 0
  %494 = vmatpush1.bf16.msra.mxu0 0
  %495 = vmatprep.subr.bf16.mxu0 0
  %496 = vmatpush1.bf16.msra.mxu0 0
  %497 = vmatprep.subr.bf16.mxu0 0
  %498 = vmatpush1.bf16.msra.mxu0 0
  %499 = vmatprep.subr.bf16.mxu0 0
  %500 = vmatpush1.bf16.msra.mxu0 0
  %501 = vmatprep.subr.bf16.mxu0 0
  %502 = vmatpush1.bf16.msra.mxu0 0
  %503 = vmatprep.mubr.bf16.mxu0 0
  %504 = vmatmul.mubr.bf16.gmra.mrb[0].mxu0 %v469
  %v505 = vpop.f32.mrb[0].mxu0
  %v506 = vadd.f32 0.0, %v505
  %v507 = vpop.f32.mrb[0].mxu0
  %v508 = vpop.f32.mrb[0].mxu0
  %v509 = vpop.f32.mrb[0].mxu0
  %510 = vdwg.mxu0
  %v511 = vadd.f32 %v506, %v212
  %513 = vrot.lane.b32.xlu0 %v436, 64
  %v514 = vpop.permute.xlu0 %513
  %v516 = vadd.f32 %v511, %v514
  %v517 = vtanh.pop %v516
  %v518 = vmul.f32 %v517, 0.5
  %v519 = vadd.f32 %v518, 0.5
  %v520 = vmul.f32 %v519, %v379
  %522 = vrot.lane.b32.xlu0 %v517, 80
  %v523 = vpop.permute.xlu0 %522
  %v525 = vmul.f32 %v519, %v523
  %527 = vrot.lane.b32.xlu0 %v525, 16
  %v528 = vpop.permute.xlu0 %527
  %v530 = vadd.f32 %v520, %v528
  %v531 = vtanh.pop %v530
  %533 = vrot.lane.b32.xlu0 %v531, 16
  %v534 = vpop.permute.xlu0 %533
  %v536 = vmul.f32 %v519, %v534
  %v537 = vld [vmem:[%s2 + $0x18] sm:$0xf]
  %v538 = vld [vmem:[%s2 + $0x1c] sm:$0xf]
  %v539 = vpack.c.bf16 %v536, %v536
  %541 = vrot.lane.b32.xlu0 %v539, 32
  %v542 = vpop.permute.xlu0 %541
  %v545 = vunpack.c.l.b16 %v537
  %v546 = vunpack.c.l.b16 %v538
  %v547 = vpack.c.b16 %v546, %v545
  %v550 = vsel %vm41, %v542, 0
  %552 = vmatprep.subr.bf16.mxu0 0
  %553 = vmatpush1.bf16.msra.mxu0 %v547
  %554 = vmatprep.subr.bf16.mxu0 0
  %555 = vmatpush1.bf16.msra.mxu0 0
  %556 = vmatprep.subr.bf16.mxu0 0
  %557 = vmatpush1.bf16.msra.mxu0 0
  %558 = vmatprep.subr.bf16.mxu0 0
  %559 = vmatpush1.bf16.msra.mxu0 0
  %560 = vmatprep.subr.bf16.mxu0 0
  %561 = vmatpush1.bf16.msra.mxu0 0
  %562 = vmatprep.subr.bf16.mxu0 0
  %563 = vmatpush1.bf16.msra.mxu0 0
  %564 = vmatprep.subr.bf16.mxu0 0
  %565 = vmatpush1.bf16.msra.mxu0 0
  %566 = vmatprep.subr.bf16.mxu0 0
  %567 = vmatpush1.bf16.msra.mxu0 0
  %568 = vmatprep.subr.bf16.mxu0 0
  %569 = vmatpush1.bf16.msra.mxu0 0
  %570 = vmatprep.subr.bf16.mxu0 0
  %571 = vmatpush1.bf16.msra.mxu0 0
  %572 = vmatprep.subr.bf16.mxu0 0
  %573 = vmatpush1.bf16.msra.mxu0 0
  %574 = vmatprep.subr.bf16.mxu0 0
  %575 = vmatpush1.bf16.msra.mxu0 0
  %576 = vmatprep.subr.bf16.mxu0 0
  %577 = vmatpush1.bf16.msra.mxu0 0
  %578 = vmatprep.subr.bf16.mxu0 0
  %579 = vmatpush1.bf16.msra.mxu0 0
  %580 = vmatprep.subr.bf16.mxu0 0
  %581 = vmatpush1.bf16.msra.mxu0 0
  %582 = vmatprep.subr.bf16.mxu0 0
  %583 = vmatpush1.bf16.msra.mxu0 0
  %584 = vmatprep.mubr.bf16.mxu0 0
  %585 = vmatmul.mubr.bf16.gmra.mrb[0].mxu0 %v550
  %v586 = vpop.f32.mrb[0].mxu0
  %v587 = vadd.f32 0.0, %v586
  %v588 = vpop.f32.mrb[0].mxu0
  %v589 = vpop.f32.mrb[0].mxu0
  %v590 = vpop.f32.mrb[0].mxu0
  %591 = vdwg.mxu0
  %v592 = vadd.f32 %v441, %v587
  %v593 = vld [vmem:[%s0 + $0x18] sm:$0xff]
  %v594 = vadd.f32 %v593, %v506
  %v595 = vtanh.pop %v594
  %v596 = vmul.f32 %v595, 0.5
  %v597 = vadd.f32 %v596, 0.5
  %v598 = vmul.f32 %v597, %v457
  %600 = vrot.lane.b32.xlu0 %v595, 80
  %v601 = vpop.permute.xlu0 %600
  %v603 = vmul.f32 %v597, %v601
  %605 = vrot.lane.b32.xlu0 %v603, 16
  %v606 = vpop.permute.xlu0 %605
  %v608 = vadd.f32 %v598, %v606
  %v609 = vtanh.pop %v608
  %611 = vrot.lane.b32.xlu0 %v609, 16
  %v612 = vpop.permute.xlu0 %611
  %v614 = vmul.f32 %v597, %v612
  %v615 = vpack.c.bf16 %v614, %v614
  %617 = vrot.lane.b32.xlu0 %v615, 96
  %v618 = vpop.permute.xlu0 %617
  %v620 = vsel %vm41, %v618, 0
  %622 = vmatprep.subr.bf16.mxu0 0
  %623 = vmatpush1.bf16.msra.mxu0 %v39
  %624 = vmatprep.subr.bf16.mxu0 0
  %625 = vmatpush1.bf16.msra.mxu0 0
  %626 = vmatprep.subr.bf16.mxu0 0
  %627 = vmatpush1.bf16.msra.mxu0 0
  %628 = vmatprep.subr.bf16.mxu0 0
  %629 = vmatpush1.bf16.msra.mxu0 0
  %630 = vmatprep.subr.bf16.mxu0 0
  %631 = vmatpush1.bf16.msra.mxu0 0
  %632 = vmatprep.subr.bf16.mxu0 0
  %633 = vmatpush1.bf16.msra.mxu0 0
  %634 = vmatprep.subr.bf16.mxu0 0
  %635 = vmatpush1.bf16.msra.mxu0 0
  %636 = vmatprep.subr.bf16.mxu0 0
  %637 = vmatpush1.bf16.msra.mxu0 0
  %638 = vmatprep.subr.bf16.mxu0 0
  %639 = vmatpush1.bf16.msra.mxu0 0
  %640 = vmatprep.subr.bf16.mxu0 0
  %641 = vmatpush1.bf16.msra.mxu0 0
  %642 = vmatprep.subr.bf16.mxu0 0
  %643 = vmatpush1.bf16.msra.mxu0 0
  %644 = vmatprep.subr.bf16.mxu0 0
  %645 = vmatpush1.bf16.msra.mxu0 0
  %646 = vmatprep.subr.bf16.mxu0 0
  %647 = vmatpush1.bf16.msra.mxu0 0
  %648 = vmatprep.subr.bf16.mxu0 0
  %649 = vmatpush1.bf16.msra.mxu0 0
  %650 = vmatprep.subr.bf16.mxu0 0
  %651 = vmatpush1.bf16.msra.mxu0 0
  %652 = vmatprep.subr.bf16.mxu0 0
  %653 = vmatpush1.bf16.msra.mxu0 0
  %654 = vmatprep.mubr.bf16.mxu0 0
  %655 = vmatmul.mubr.bf16.gmra.mrb[0].mxu0 %v620
  %v656 = vpop.f32.mrb[0].mxu0
  %v657 = vadd.f32 0.0, %v656
  %v658 = vpop.f32.mrb[0].mxu0
  %v659 = vpop.f32.mrb[0].mxu0
  %v660 = vpop.f32.mrb[0].mxu0
  %661 = vdwg.mxu0
  %v662 = vadd.f32 %v657, %v212
  %664 = vrot.lane.b32.xlu0 %v587, 64
  %v665 = vpop.permute.xlu0 %664
  %v667 = vadd.f32 %v662, %v665
  %v668 = vtanh.pop %v667
  %v669 = vmul.f32 %v668, 0.5
  %v670 = vadd.f32 %v669, 0.5
  %v671 = vmul.f32 %v670, %v530
  %673 = vrot.lane.b32.xlu0 %v668, 80
  %v674 = vpop.permute.xlu0 %673
  %v676 = vmul.f32 %v670, %v674
  %678 = vrot.lane.b32.xlu0 %v676, 16
  %v679 = vpop.permute.xlu0 %678
  %v681 = vadd.f32 %v671, %v679
  %v682 = vtanh.pop %v681
  %684 = vrot.lane.b32.xlu0 %v682, 16
  %v685 = vpop.permute.xlu0 %684
  %v687 = vmul.f32 %v670, %v685
  %v688 = vld [vmem:[%s2 + $0x20] sm:$0xf]
  %v689 = vld [vmem:[%s2 + $0x24] sm:$0xf]
  %v690 = vpack.c.bf16 %v687, %v687
  %692 = vrot.lane.b32.xlu0 %v690, 32
  %v693 = vpop.permute.xlu0 %692
  %v696 = vunpack.c.l.b16 %v688
  %v697 = vunpack.c.l.b16 %v689
  %v698 = vpack.c.b16 %v697, %v696
  %v701 = vsel %vm41, %v693, 0
  %703 = vmatprep.subr.bf16.mxu0 0
  %704 = vmatpush1.bf16.msra.mxu0 %v698
  %705 = vmatprep.subr.bf16.mxu0 0
  %706 = vmatpush1.bf16.msra.mxu0 0
  %707 = vmatprep.subr.bf16.mxu0 0
  %708 = vmatpush1.bf16.msra.mxu0 0
  %709 = vmatprep.subr.bf16.mxu0 0
  %710 = vmatpush1.bf16.msra.mxu0 0
  %711 = vmatprep.subr.bf16.mxu0 0
  %712 = vmatpush1.bf16.msra.mxu0 0
  %713 = vmatprep.subr.bf16.mxu0 0
  %714 = vmatpush1.bf16.msra.mxu0 0
  %715 = vmatprep.subr.bf16.mxu0 0
  %716 = vmatpush1.bf16.msra.mxu0 0
  %717 = vmatprep.subr.bf16.mxu0 0
  %718 = vmatpush1.bf16.msra.mxu0 0
  %719 = vmatprep.subr.bf16.mxu0 0
  %720 = vmatpush1.bf16.msra.mxu0 0
  %721 = vmatprep.subr.bf16.mxu0 0
  %722 = vmatpush1.bf16.msra.mxu0 0
  %723 = vmatprep.subr.bf16.mxu0 0
  %724 = vmatpush1.bf16.msra.mxu0 0
  %725 = vmatprep.subr.bf16.mxu0 0
  %726 = vmatpush1.bf16.msra.mxu0 0
  %727 = vmatprep.subr.bf16.mxu0 0
  %728 = vmatpush1.bf16.msra.mxu0 0
  %729 = vmatprep.subr.bf16.mxu0 0
  %730 = vmatpush1.bf16.msra.mxu0 0
  %731 = vmatprep.subr.bf16.mxu0 0
  %732 = vmatpush1.bf16.msra.mxu0 0
  %733 = vmatprep.subr.bf16.mxu0 0
  %734 = vmatpush1.bf16.msra.mxu0 0
  %735 = vmatprep.mubr.bf16.mxu0 0
  %736 = vmatmul.mubr.bf16.gmra.mrb[0].mxu0 %v701
  %v737 = vpop.f32.mrb[0].mxu0
  %v738 = vadd.f32 0.0, %v737
  %v739 = vpop.f32.mrb[0].mxu0
  %v740 = vpop.f32.mrb[0].mxu0
  %v741 = vpop.f32.mrb[0].mxu0
  %742 = vdwg.mxu0
  %v743 = vadd.f32 %v592, %v738
  %v744 = vld [vmem:[%s0 + $0x20] sm:$0xff]
  %v745 = vadd.f32 %v744, %v657
  %v746 = vtanh.pop %v745
  %v747 = vmul.f32 %v746, 0.5
  %v748 = vadd.f32 %v747, 0.5
  %v749 = vmul.f32 %v748, %v608
  %751 = vrot.lane.b32.xlu0 %v746, 80
  %v752 = vpop.permute.xlu0 %751
  %v754 = vmul.f32 %v748, %v752
  %756 = vrot.lane.b32.xlu0 %v754, 16
  %v757 = vpop.permute.xlu0 %756
  %v759 = vadd.f32 %v749, %v757
  %v760 = vtanh.pop %v759
  %762 = vrot.lane.b32.xlu0 %v760, 16
  %v763 = vpop.permute.xlu0 %762
  %v765 = vmul.f32 %v748, %v763
  %v766 = vpack.c.bf16 %v765, %v765
  %768 = vrot.lane.b32.xlu0 %v766, 96
  %v769 = vpop.permute.xlu0 %768
  %v771 = vsel %vm41, %v769, 0
  %773 = vmatprep.subr.bf16.mxu0 0
  %774 = vmatpush1.bf16.msra.mxu0 %v39
  %775 = vmatprep.subr.bf16.mxu0 0
  %776 = vmatpush1.bf16.msra.mxu0 0
  %777 = vmatprep.subr.bf16.mxu0 0
  %778 = vmatpush1.bf16.msra.mxu0 0
  %779 = vmatprep.subr.bf16.mxu0 0
  %780 = vmatpush1.bf16.msra.mxu0 0
  %781 = vmatprep.subr.bf16.mxu0 0
  %782 = vmatpush1.bf16.msra.mxu0 0
  %783 = vmatprep.subr.bf16.mxu0 0
  %784 = vmatpush1.bf16.msra.mxu0 0
  %785 = vmatprep.subr.bf16.mxu0 0
  %786 = vmatpush1.bf16.msra.mxu0 0
  %787 = vmatprep.subr.bf16.mxu0 0
  %788 = vmatpush1.bf16.msra.mxu0 0
  %789 = vmatprep.subr.bf16.mxu0 0
  %790 = vmatpush1.bf16.msra.mxu0 0
  %791 = vmatprep.subr.bf16.mxu0 0
  %792 = vmatpush1.bf16.msra.mxu0 0
  %793 = vmatprep.subr.bf16.mxu0 0
  %794 = vmatpush1.bf16.msra.mxu0 0
  %795 = vmatprep.subr.bf16.mxu0 0
  %796 = vmatpush1.bf16.msra.mxu0 0
  %797 = vmatprep.subr.bf16.mxu0 0
  %798 = vmatpush1.bf16.msra.mxu0 0
  %799 = vmatprep.subr.bf16.mxu0 0
  %800 = vmatpush1.bf16.msra.mxu0 0
  %801 = vmatprep.subr.bf16.mxu0 0
  %802 = vmatpush1.bf16.msra.mxu0 0
  %803 = vmatprep.subr.bf16.mxu0 0
  %804 = vmatpush1.bf16.msra.mxu0 0
  %805 = vmatprep.mubr.bf16.mxu0 0
  %806 = vmatmul.mubr.bf16.gmra.mrb[0].mxu0 %v771
  %v807 = vpop.f32.mrb[0].mxu0
  %v808 = vadd.f32 0.0, %v807
  %v809 = vpop.f32.mrb[0].mxu0
  %v810 = vpop.f32.mrb[0].mxu0
  %v811 = vpop.f32.mrb[0].mxu0
  %812 = vdwg.mxu0
  %v813 = vadd.f32 %v808, %v212
  %815 = vrot.lane.b32.xlu0 %v738, 64
  %v816 = vpop.permute.xlu0 %815
  %v818 = vadd.f32 %v813, %v816
  %v819 = vtanh.pop %v818
  %v820 = vmul.f32 %v819, 0.5
  %v821 = vadd.f32 %v820, 0.5
  %v822 = vmul.f32 %v821, %v681
  %824 = vrot.lane.b32.xlu0 %v819, 80
  %v825 = vpop.permute.xlu0 %824
  %v827 = vmul.f32 %v821, %v825
  %829 = vrot.lane.b32.xlu0 %v827, 16
  %v830 = vpop.permute.xlu0 %829
  %v832 = vadd.f32 %v822, %v830
  %v833 = vtanh.pop %v832
  %835 = vrot.lane.b32.xlu0 %v833, 16
  %v836 = vpop.permute.xlu0 %835
  %v838 = vmul.f32 %v821, %v836
  %v839 = vld [vmem:[%s2 + $0x28] sm:$0xf]
  %v840 = vld [vmem:[%s2 + $0x2c] sm:$0xf]
  %v841 = vpack.c.bf16 %v838, %v838
  %843 = vrot.lane.b32.xlu0 %v841, 32
  %v844 = vpop.permute.xlu0 %843
  %v847 = vunpack.c.l.b16 %v839
  %v848 = vunpack.c.l.b16 %v840
  %v849 = vpack.c.b16 %v848, %v847
  %v852 = vsel %vm41, %v844, 0
  %854 = vmatprep.subr.bf16.mxu0 0
  %855 = vmatpush1.bf16.msra.mxu0 %v849
  %856 = vmatprep.subr.bf16.mxu0 0
  %857 = vmatpush1.bf16.msra.mxu0 0
  %858 = vmatprep.subr.bf16.mxu0 0
  %859 = vmatpush1.bf16.msra.mxu0 0
  %860 = vmatprep.subr.bf16.mxu0 0
  %861 = vmatpush1.bf16.msra.mxu0 0
  %862 = vmatprep.subr.bf16.mxu0 0
  %863 = vmatpush1.bf16.msra.mxu0 0
  %864 = vmatprep.subr.bf16.mxu0 0
  %865 = vmatpush1.bf16.msra.mxu0 0
  %866 = vmatprep.subr.bf16.mxu0 0
  %867 = vmatpush1.bf16.msra.mxu0 0
  %868 = vmatprep.subr.bf16.mxu0 0
  %869 = vmatpush1.bf16.msra.mxu0 0
  %870 = vmatprep.subr.bf16.mxu0 0
  %871 = vmatpush1.bf16.msra.mxu0 0
  %872 = vmatprep.subr.bf16.mxu0 0
  %873 = vmatpush1.bf16.msra.mxu0 0
  %874 = vmatprep.subr.bf16.mxu0 0
  %875 = vmatpush1.bf16.msra.mxu0 0
  %876 = vmatprep.subr.bf16.mxu0 0
  %877 = vmatpush1.bf16.msra.mxu0 0
  %878 = vmatprep.subr.bf16.mxu0 0
  %879 = vmatpush1.bf16.msra.mxu0 0
  %880 = vmatprep.subr.bf16.mxu0 0
  %881 = vmatpush1.bf16.msra.mxu0 0
  %882 = vmatprep.subr.bf16.mxu0 0
  %883 = vmatpush1.bf16.msra.mxu0 0
  %884 = vmatprep.subr.bf16.mxu0 0
  %885 = vmatpush1.bf16.msra.mxu0 0
  %886 = vmatprep.mubr.bf16.mxu0 0
  %887 = vmatmul.mubr.bf16.gmra.mrb[0].mxu0 %v852
  %v888 = vpop.f32.mrb[0].mxu0
  %v889 = vadd.f32 0.0, %v888
  %v890 = vpop.f32.mrb[0].mxu0
  %v891 = vpop.f32.mrb[0].mxu0
  %v892 = vpop.f32.mrb[0].mxu0
  %893 = vdwg.mxu0
  %v894 = vadd.f32 %v743, %v889
  %v895 = vld [vmem:[%s0 + $0x28] sm:$0xff]
  %v896 = vadd.f32 %v895, %v808
  %v897 = vtanh.pop %v896
  %v898 = vmul.f32 %v897, 0.5
  %v899 = vadd.f32 %v898, 0.5
  %v900 = vmul.f32 %v899, %v759
  %902 = vrot.lane.b32.xlu0 %v897, 80
  %v903 = vpop.permute.xlu0 %902
  %v905 = vmul.f32 %v899, %v903
  %907 = vrot.lane.b32.xlu0 %v905, 16
  %v908 = vpop.permute.xlu0 %907
  %v910 = vadd.f32 %v900, %v908
  %v911 = vtanh.pop %v910
  %913 = vrot.lane.b32.xlu0 %v911, 16
  %v914 = vpop.permute.xlu0 %913
  %v916 = vmul.f32 %v899, %v914
  %v917 = vpack.c.bf16 %v916, %v916
  %919 = vrot.lane.b32.xlu0 %v917, 96
  %v920 = vpop.permute.xlu0 %919
  %v922 = vsel %vm41, %v920, 0
  %924 = vmatprep.subr.bf16.mxu0 0
  %925 = vmatpush1.bf16.msra.mxu0 %v39
  %926 = vmatprep.subr.bf16.mxu0 0
  %927 = vmatpush1.bf16.msra.mxu0 0
  %928 = vmatprep.subr.bf16.mxu0 0
  %929 = vmatpush1.bf16.msra.mxu0 0
  %930 = vmatprep.subr.bf16.mxu0 0
  %931 = vmatpush1.bf16.msra.mxu0 0
  %932 = vmatprep.subr.bf16.mxu0 0
  %933 = vmatpush1.bf16.msra.mxu0 0
  %934 = vmatprep.subr.bf16.mxu0 0
  %935 = vmatpush1.bf16.msra.mxu0 0
  %936 = vmatprep.subr.bf16.mxu0 0
  %937 = vmatpush1.bf16.msra.mxu0 0
  %938 = vmatprep.subr.bf16.mxu0 0
  %939 = vmatpush1.bf16.msra.mxu0 0
  %940 = vmatprep.subr.bf16.mxu0 0
  %941 = vmatpush1.bf16.msra.mxu0 0
  %942 = vmatprep.subr.bf16.mxu0 0
  %943 = vmatpush1.bf16.msra.mxu0 0
  %944 = vmatprep.subr.bf16.mxu0 0
  %945 = vmatpush1.bf16.msra.mxu0 0
  %946 = vmatprep.subr.bf16.mxu0 0
  %947 = vmatpush1.bf16.msra.mxu0 0
  %948 = vmatprep.subr.bf16.mxu0 0
  %949 = vmatpush1.bf16.msra.mxu0 0
  %950 = vmatprep.subr.bf16.mxu0 0
  %951 = vmatpush1.bf16.msra.mxu0 0
  %952 = vmatprep.subr.bf16.mxu0 0
  %953 = vmatpush1.bf16.msra.mxu0 0
  %954 = vmatprep.subr.bf16.mxu0 0
  %955 = vmatpush1.bf16.msra.mxu0 0
  %956 = vmatprep.mubr.bf16.mxu0 0
  %957 = vmatmul.mubr.bf16.gmra.mrb[0].mxu0 %v922
  %v958 = vpop.f32.mrb[0].mxu0
  %v959 = vadd.f32 0.0, %v958
  %v960 = vpop.f32.mrb[0].mxu0
  %v961 = vpop.f32.mrb[0].mxu0
  %v962 = vpop.f32.mrb[0].mxu0
  %963 = vdwg.mxu0
  %v964 = vadd.f32 %v959, %v212
  %966 = vrot.lane.b32.xlu0 %v889, 64
  %v967 = vpop.permute.xlu0 %966
  %v969 = vadd.f32 %v964, %v967
  %v970 = vtanh.pop %v969
  %v971 = vmul.f32 %v970, 0.5
  %v972 = vadd.f32 %v971, 0.5
  %v973 = vmul.f32 %v972, %v832
  %975 = vrot.lane.b32.xlu0 %v970, 80
  %v976 = vpop.permute.xlu0 %975
  %v978 = vmul.f32 %v972, %v976
  %980 = vrot.lane.b32.xlu0 %v978, 16
  %v981 = vpop.permute.xlu0 %980
  %v983 = vadd.f32 %v973, %v981
  %v984 = vtanh.pop %v983
  %986 = vrot.lane.b32.xlu0 %v984, 16
  %v987 = vpop.permute.xlu0 %986
  %v989 = vmul.f32 %v972, %v987
  %v990 = vld [vmem:[%s2 + $0x30] sm:$0xf]
  %v991 = vld [vmem:[%s2 + $0x34] sm:$0xf]
  %v992 = vpack.c.bf16 %v989, %v989
  %994 = vrot.lane.b32.xlu0 %v992, 32
  %v995 = vpop.permute.xlu0 %994
  %v998 = vunpack.c.l.b16 %v990
  %v999 = vunpack.c.l.b16 %v991
  %v1000 = vpack.c.b16 %v999, %v998
  %v1003 = vsel %vm41, %v995, 0
  %1005 = vmatprep.subr.bf16.mxu0 0
  %1006 = vmatpush1.bf16.msra.mxu0 %v1000
  %1007 = vmatprep.subr.bf16.mxu0 0
  %1008 = vmatpush1.bf16.msra.mxu0 0
  %1009 = vmatprep.subr.bf16.mxu0 0
  %1010 = vmatpush1.bf16.msra.mxu0 0
  %1011 = vmatprep.subr.bf16.mxu0 0
  %1012 = vmatpush1.bf16.msra.mxu0 0
  %1013 = vmatprep.subr.bf16.mxu0 0
  %1014 = vmatpush1.bf16.msra.mxu0 0
  %1015 = vmatprep.subr.bf16.mxu0 0
  %1016 = vmatpush1.bf16.msra.mxu0 0
  %1017 = vmatprep.subr.bf16.mxu0 0
  %1018 = vmatpush1.bf16.msra.mxu0 0
  %1019 = vmatprep.subr.bf16.mxu0 0
  %1020 = vmatpush1.bf16.msra.mxu0 0
  %1021 = vmatprep.subr.bf16.mxu0 0
  %1022 = vmatpush1.bf16.msra.mxu0 0
  %1023 = vmatprep.subr.bf16.mxu0 0
  %1024 = vmatpush1.bf16.msra.mxu0 0
  %1025 = vmatprep.subr.bf16.mxu0 0
  %1026 = vmatpush1.bf16.msra.mxu0 0
  %1027 = vmatprep.subr.bf16.mxu0 0
  %1028 = vmatpush1.bf16.msra.mxu0 0
  %1029 = vmatprep.subr.bf16.mxu0 0
  %1030 = vmatpush1.bf16.msra.mxu0 0
  %1031 = vmatprep.subr.bf16.mxu0 0
  %1032 = vmatpush1.bf16.msra.mxu0 0
  %1033 = vmatprep.subr.bf16.mxu0 0
  %1034 = vmatpush1.bf16.msra.mxu0 0
  %1035 = vmatprep.subr.bf16.mxu0 0
  %1036 = vmatpush1.bf16.msra.mxu0 0
  %1037 = vmatprep.mubr.bf16.mxu0 0
  %1038 = vmatmul.mubr.bf16.gmra.mrb[0].mxu0 %v1003
  %v1039 = vpop.f32.mrb[0].mxu0
  %v1040 = vadd.f32 0.0, %v1039
  %v1041 = vpop.f32.mrb[0].mxu0
  %v1042 = vpop.f32.mrb[0].mxu0
  %v1043 = vpop.f32.mrb[0].mxu0
  %1044 = vdwg.mxu0
  %v1045 = vadd.f32 %v894, %v1040
  %v1046 = vld [vmem:[%s0 + $0x30] sm:$0xff]
  %v1047 = vadd.f32 %v1046, %v959
  %v1048 = vtanh.pop %v1047
  %v1049 = vmul.f32 %v1048, 0.5
  %v1050 = vadd.f32 %v1049, 0.5
  %v1051 = vmul.f32 %v1050, %v910
  %1053 = vrot.lane.b32.xlu0 %v1048, 80
  %v1054 = vpop.permute.xlu0 %1053
  %v1056 = vmul.f32 %v1050, %v1054
  %1058 = vrot.lane.b32.xlu0 %v1056, 16
  %v1059 = vpop.permute.xlu0 %1058
  %v1061 = vadd.f32 %v1051, %v1059
  %v1062 = vtanh.pop %v1061
  %1064 = vrot.lane.b32.xlu0 %v1062, 16
  %v1065 = vpop.permute.xlu0 %1064
  %v1067 = vmul.f32 %v1050, %v1065
  %v1068 = vpack.c.bf16 %v1067, %v1067
  %1070 = vrot.lane.b32.xlu0 %v1068, 96
  %v1071 = vpop.permute.xlu0 %1070
  %v1073 = vsel %vm41, %v1071, 0
  %1075 = vmatprep.subr.bf16.mxu0 0
  %1076 = vmatpush1.bf16.msra.mxu0 %v39
  %1077 = vmatprep.subr.bf16.mxu0 0
  %1078 = vmatpush1.bf16.msra.mxu0 0
  %1079 = vmatprep.subr.bf16.mxu0 0
  %1080 = vmatpush1.bf16.msra.mxu0 0
  %1081 = vmatprep.subr.bf16.mxu0 0
  %1082 = vmatpush1.bf16.msra.mxu0 0
  %1083 = vmatprep.subr.bf16.mxu0 0
  %1084 = vmatpush1.bf16.msra.mxu0 0
  %1085 = vmatprep.subr.bf16.mxu0 0
  %1086 = vmatpush1.bf16.msra.mxu0 0
  %1087 = vmatprep.subr.bf16.mxu0 0
  %1088 = vmatpush1.bf16.msra.mxu0 0
  %1089 = vmatprep.subr.bf16.mxu0 0
  %1090 = vmatpush1.bf16.msra.mxu0 0
  %1091 = vmatprep.subr.bf16.mxu0 0
  %1092 = vmatpush1.bf16.msra.mxu0 0
  %1093 = vmatprep.subr.bf16.mxu0 0
  %1094 = vmatpush1.bf16.msra.mxu0 0
  %1095 = vmatprep.subr.bf16.mxu0 0
  %1096 = vmatpush1.bf16.msra.mxu0 0
  %1097 = vmatprep.subr.bf16.mxu0 0
  %1098 = vmatpush1.bf16.msra.mxu0 0
  %1099 = vmatprep.subr.bf16.mxu0 0
  %1100 = vmatpush1.bf16.msra.mxu0 0
  %1101 = vmatprep.subr.bf16.mxu0 0
  %1102 = vmatpush1.bf16.msra.mxu0 0
  %1103 = vmatprep.subr.bf16.mxu0 0
  %1104 = vmatpush1.bf16.msra.mxu0 0
  %1105 = vmatprep.subr.bf16.mxu0 0
  %1106 = vmatpush1.bf16.msra.mxu0 0
  %1107 = vmatprep.mubr.bf16.mxu0 0
  %1108 = vmatmul.mubr.bf16.gmra.mrb[0].mxu0 %v1073
  %v1109 = vpop.f32.mrb[0].mxu0
  %v1110 = vadd.f32 0.0, %v1109
  %v1111 = vpop.f32.mrb[0].mxu0
  %v1112 = vpop.f32.mrb[0].mxu0
  %v1113 = vpop.f32.mrb[0].mxu0
  %1114 = vdwg.mxu0
  %v1115 = vadd.f32 %v1110, %v212
  %1117 = vrot.lane.b32.xlu0 %v1040, 64
  %v1118 = vpop.permute.xlu0 %1117
  %v1120 = vadd.f32 %v1115, %v1118
  %v1121 = vtanh.pop %v1120
  %v1122 = vmul.f32 %v1121, 0.5
  %v1123 = vadd.f32 %v1122, 0.5
  %v1124 = vmul.f32 %v1123, %v983
  %1126 = vrot.lane.b32.xlu0 %v1121, 80
  %v1127 = vpop.permute.xlu0 %1126
  %v1129 = vmul.f32 %v1123, %v1127
  %1131 = vrot.lane.b32.xlu0 %v1129, 16
  %v1132 = vpop.permute.xlu0 %1131
  %v1134 = vadd.f32 %v1124, %v1132
  %v1135 = vtanh.pop %v1134
  %1137 = vrot.lane.b32.xlu0 %v1135, 16
  %v1138 = vpop.permute.xlu0 %1137
  %v1140 = vmul.f32 %v1123, %v1138
  %v1141 = vld [vmem:[%s2 + $0x38] sm:$0xf]
  %v1142 = vld [vmem:[%s2 + $0x3c] sm:$0xf]
  %v1143 = vpack.c.bf16 %v1140, %v1140
  %1145 = vrot.lane.b32.xlu0 %v1143, 32
  %v1146 = vpop.permute.xlu0 %1145
  %v1149 = vunpack.c.l.b16 %v1141
  %v1150 = vunpack.c.l.b16 %v1142
  %v1151 = vpack.c.b16 %v1150, %v1149
  %v1154 = vsel %vm41, %v1146, 0
  %1156 = vmatprep.subr.bf16.mxu0 0
  %1157 = vmatpush1.bf16.msra.mxu0 %v1151
  %1158 = vmatprep.subr.bf16.mxu0 0
  %1159 = vmatpush1.bf16.msra.mxu0 0
  %1160 = vmatprep.subr.bf16.mxu0 0
  %1161 = vmatpush1.bf16.msra.mxu0 0
  %1162 = vmatprep.subr.bf16.mxu0 0
  %1163 = vmatpush1.bf16.msra.mxu0 0
  %1164 = vmatprep.subr.bf16.mxu0 0
  %1165 = vmatpush1.bf16.msra.mxu0 0
  %1166 = vmatprep.subr.bf16.mxu0 0
  %1167 = vmatpush1.bf16.msra.mxu0 0
  %1168 = vmatprep.subr.bf16.mxu0 0
  %1169 = vmatpush1.bf16.msra.mxu0 0
  %1170 = vmatprep.subr.bf16.mxu0 0
  %1171 = vmatpush1.bf16.msra.mxu0 0
  %1172 = vmatprep.subr.bf16.mxu0 0
  %1173 = vmatpush1.bf16.msra.mxu0 0
  %1174 = vmatprep.subr.bf16.mxu0 0
  %1175 = vmatpush1.bf16.msra.mxu0 0
  %1176 = vmatprep.subr.bf16.mxu0 0
  %1177 = vmatpush1.bf16.msra.mxu0 0
  %1178 = vmatprep.subr.bf16.mxu0 0
  %1179 = vmatpush1.bf16.msra.mxu0 0
  %1180 = vmatprep.subr.bf16.mxu0 0
  %1181 = vmatpush1.bf16.msra.mxu0 0
  %1182 = vmatprep.subr.bf16.mxu0 0
  %1183 = vmatpush1.bf16.msra.mxu0 0
  %1184 = vmatprep.subr.bf16.mxu0 0
  %1185 = vmatpush1.bf16.msra.mxu0 0
  %1186 = vmatprep.subr.bf16.mxu0 0
  %1187 = vmatpush1.bf16.msra.mxu0 0
  %1188 = vmatprep.mubr.bf16.mxu0 0
  %1189 = vmatmul.mubr.bf16.gmra.mrb[0].mxu0 %v1154
  %v1190 = vpop.f32.mrb[0].mxu0
  %v1191 = vadd.f32 0.0, %v1190
  %v1192 = vpop.f32.mrb[0].mxu0
  %v1193 = vpop.f32.mrb[0].mxu0
  %v1194 = vpop.f32.mrb[0].mxu0
  %1195 = vdwg.mxu0
  %v1196 = vadd.f32 %v1045, %v1191
  %v1197 = vld [vmem:[%s0 + $0x38] sm:$0xff]
  %v1198 = vadd.f32 %v1197, %v1110
  %v1199 = vtanh.pop %v1198
  %v1200 = vmul.f32 %v1199, 0.5
  %v1201 = vadd.f32 %v1200, 0.5
  %v1202 = vmul.f32 %v1201, %v1061
  %1204 = vrot.lane.b32.xlu0 %v1199, 80
  %v1205 = vpop.permute.xlu0 %1204
  %v1207 = vmul.f32 %v1201, %v1205
  %1209 = vrot.lane.b32.xlu0 %v1207, 16
  %v1210 = vpop.permute.xlu0 %1209
  %v1212 = vadd.f32 %v1202, %v1210
  %v1213 = vtanh.pop %v1212
  %1215 = vrot.lane.b32.xlu0 %v1213, 16
  %v1216 = vpop.permute.xlu0 %1215
  %v1218 = vmul.f32 %v1201, %v1216
  %v1219 = vpack.c.bf16 %v1218, %v1218
  %1221 = vrot.lane.b32.xlu0 %v1219, 96
  %v1222 = vpop.permute.xlu0 %1221
  %v1224 = vsel %vm41, %v1222, 0
  %1226 = vmatprep.subr.bf16.mxu0 0
  %1227 = vmatpush1.bf16.msra.mxu0 %v39
  %1228 = vmatprep.subr.bf16.mxu0 0
  %1229 = vmatpush1.bf16.msra.mxu0 0
  %1230 = vmatprep.subr.bf16.mxu0 0
  %1231 = vmatpush1.bf16.msra.mxu0 0
  %1232 = vmatprep.subr.bf16.mxu0 0
  %1233 = vmatpush1.bf16.msra.mxu0 0
  %1234 = vmatprep.subr.bf16.mxu0 0
  %1235 = vmatpush1.bf16.msra.mxu0 0
  %1236 = vmatprep.subr.bf16.mxu0 0
  %1237 = vmatpush1.bf16.msra.mxu0 0
  %1238 = vmatprep.subr.bf16.mxu0 0
  %1239 = vmatpush1.bf16.msra.mxu0 0
  %1240 = vmatprep.subr.bf16.mxu0 0
  %1241 = vmatpush1.bf16.msra.mxu0 0
  %1242 = vmatprep.subr.bf16.mxu0 0
  %1243 = vmatpush1.bf16.msra.mxu0 0
  %1244 = vmatprep.subr.bf16.mxu0 0
  %1245 = vmatpush1.bf16.msra.mxu0 0
  %1246 = vmatprep.subr.bf16.mxu0 0
  %1247 = vmatpush1.bf16.msra.mxu0 0
  %1248 = vmatprep.subr.bf16.mxu0 0
  %1249 = vmatpush1.bf16.msra.mxu0 0
  %1250 = vmatprep.subr.bf16.mxu0 0
  %1251 = vmatpush1.bf16.msra.mxu0 0
  %1252 = vmatprep.subr.bf16.mxu0 0
  %1253 = vmatpush1.bf16.msra.mxu0 0
  %1254 = vmatprep.subr.bf16.mxu0 0
  %1255 = vmatpush1.bf16.msra.mxu0 0
  %1256 = vmatprep.subr.bf16.mxu0 0
  %1257 = vmatpush1.bf16.msra.mxu0 0
  %1258 = vmatprep.mubr.bf16.mxu0 0
  %1259 = vmatmul.mubr.bf16.gmra.mrb[0].mxu0 %v1224
  %v1260 = vpop.f32.mrb[0].mxu0
  %v1261 = vadd.f32 0.0, %v1260
  %v1262 = vpop.f32.mrb[0].mxu0
  %v1263 = vpop.f32.mrb[0].mxu0
  %v1264 = vpop.f32.mrb[0].mxu0
  %1265 = vdwg.mxu0
  %v1266 = vadd.f32 %v1261, %v212
  %1268 = vrot.lane.b32.xlu0 %v1191, 64
  %v1269 = vpop.permute.xlu0 %1268
  %v1271 = vadd.f32 %v1266, %v1269
  %v1272 = vtanh.pop %v1271
  %v1273 = vmul.f32 %v1272, 0.5
  %v1274 = vadd.f32 %v1273, 0.5
  %v1275 = vmul.f32 %v1274, %v1134
  %1277 = vrot.lane.b32.xlu0 %v1272, 80
  %v1278 = vpop.permute.xlu0 %1277
  %v1280 = vmul.f32 %v1274, %v1278
  %1282 = vrot.lane.b32.xlu0 %v1280, 16
  %v1283 = vpop.permute.xlu0 %1282
  %v1285 = vadd.f32 %v1275, %v1283
  %v1286 = vtanh.pop %v1285
  %1288 = vrot.lane.b32.xlu0 %v1286, 16
  %v1289 = vpop.permute.xlu0 %1288
  %v1291 = vmul.f32 %v1274, %v1289
  %v1292 = vld [vmem:[%s2 + $0x40] sm:$0xf]
  %v1293 = vld [vmem:[%s2 + $0x44] sm:$0xf]
  %v1294 = vpack.c.bf16 %v1291, %v1291
  %1296 = vrot.lane.b32.xlu0 %v1294, 32
  %v1297 = vpop.permute.xlu0 %1296
  %v1300 = vunpack.c.l.b16 %v1292
  %v1301 = vunpack.c.l.b16 %v1293
  %v1302 = vpack.c.b16 %v1301, %v1300
  %v1305 = vsel %vm41, %v1297, 0
  %1307 = vmatprep.subr.bf16.mxu0 0
  %1308 = vmatpush1.bf16.msra.mxu0 %v1302
  %1309 = vmatprep.subr.bf16.mxu0 0
  %1310 = vmatpush1.bf16.msra.mxu0 0
  %1311 = vmatprep.subr.bf16.mxu0 0
  %1312 = vmatpush1.bf16.msra.mxu0 0
  %1313 = vmatprep.subr.bf16.mxu0 0
  %1314 = vmatpush1.bf16.msra.mxu0 0
  %1315 = vmatprep.subr.bf16.mxu0 0
  %1316 = vmatpush1.bf16.msra.mxu0 0
  %1317 = vmatprep.subr.bf16.mxu0 0
  %1318 = vmatpush1.bf16.msra.mxu0 0
  %1319 = vmatprep.subr.bf16.mxu0 0
  %1320 = vmatpush1.bf16.msra.mxu0 0
  %1321 = vmatprep.subr.bf16.mxu0 0
  %1322 = vmatpush1.bf16.msra.mxu0 0
  %1323 = vmatprep.subr.bf16.mxu0 0
  %1324 = vmatpush1.bf16.msra.mxu0 0
  %1325 = vmatprep.subr.bf16.mxu0 0
  %1326 = vmatpush1.bf16.msra.mxu0 0
  %1327 = vmatprep.subr.bf16.mxu0 0
  %1328 = vmatpush1.bf16.msra.mxu0 0
  %1329 = vmatprep.subr.bf16.mxu0 0
  %1330 = vmatpush1.bf16.msra.mxu0 0
  %1331 = vmatprep.subr.bf16.mxu0 0
  %1332 = vmatpush1.bf16.msra.mxu0 0
  %1333 = vmatprep.subr.bf16.mxu0 0
  %1334 = vmatpush1.bf16.msra.mxu0 0
  %1335 = vmatprep.subr.bf16.mxu0 0
  %1336 = vmatpush1.bf16.msra.mxu0 0
  %1337 = vmatprep.subr.bf16.mxu0 0
  %1338 = vmatpush1.bf16.msra.mxu0 0
  %1339 = vmatprep.mubr.bf16.mxu0 0
  %1340 = vmatmul.mubr.bf16.gmra.mrb[0].mxu0 %v1305
  %v1341 = vpop.f32.mrb[0].mxu0
  %v1342 = vadd.f32 0.0, %v1341
  %v1343 = vpop.f32.mrb[0].mxu0
  %v1344 = vpop.f32.mrb[0].mxu0
  %v1345 = vpop.f32.mrb[0].mxu0
  %1346 = vdwg.mxu0
  %v1347 = vadd.f32 %v1196, %v1342
  %v1348 = vld [vmem:[%s3 + $0x1] sm:$0x1]
  %v1349 = vlaneseq
  %v1350 = vshrl.u32 %v1349, 7
  %v1351 = vsub.s32 0, %v1350
  %v1352 = vrot.slane %v1348, %v1351
  %1354 = vrot.lane.b32.xlu0 %v1352, 64
  %v1355 = vpop.permute.xlu0 %1354
  %v1357 = vadd.f32 %v1347, %v1355
  %1359 = vrot.lane.b32.xlu0 %v1357, 64
  %v1360 = vpop.permute.xlu0 %1359
  %vm1362 = vcmask 64512
  %1363 = vst.msk [vmem:[%s5] sm:$0xff] %vm1362, %v1360
  %v1364 = vmax.f32 %v1357, 0.0
  %v1365 = vld [vmem:[%s2 + $0x48] sm:$0xf]
  %v1366 = vpack.c.bf16 %v1364, %v1364
  %v1367 = vld [vmem:[%s3 + $0x2] sm:$0x1]
  %v1368 = vlaneseq
  %v1369 = vshrl.u32 %v1368, 7
  %v1370 = vsub.s32 0, %v1369
  %v1371 = vrot.slane %v1367, %v1370
  %1373 = vrot.lane.b32.xlu0 %v1366, 64
  %v1374 = vpop.permute.xlu0 %1373
  %v1376 = vsel %vm1362, %v1374, 0
  %vm1378 = vcmask 1043456
  %v1380 = vsel %vm1378, %v1365, 0
  %1382 = vmatprep.subr.bf16.mxu0 0
  %1383 = vmatpush1.bf16.msra.mxu0 %v1380
  %1384 = vmatprep.subr.bf16.mxu0 0
  %1385 = vmatpush1.bf16.msra.mxu0 0
  %1386 = vmatprep.subr.bf16.mxu0 0
  %1387 = vmatpush1.bf16.msra.mxu0 0
  %1388 = vmatprep.subr.bf16.mxu0 0
  %1389 = vmatpush1.bf16.msra.mxu0 0
  %1390 = vmatprep.subr.bf16.mxu0 0
  %1391 = vmatpush1.bf16.msra.mxu0 0
  %1392 = vmatprep.subr.bf16.mxu0 0
  %1393 = vmatpush1.bf16.msra.mxu0 0
  %1394 = vmatprep.subr.bf16.mxu0 0
  %1395 = vmatpush1.bf16.msra.mxu0 0
  %1396 = vmatprep.subr.bf16.mxu0 0
  %1397 = vmatpush1.bf16.msra.mxu0 0
  %1398 = vmatprep.subr.bf16.mxu0 0
  %1399 = vmatpush1.bf16.msra.mxu0 0
  %1400 = vmatprep.subr.bf16.mxu0 0
  %1401 = vmatpush1.bf16.msra.mxu0 0
  %1402 = vmatprep.subr.bf16.mxu0 0
  %1403 = vmatpush1.bf16.msra.mxu0 0
  %1404 = vmatprep.subr.bf16.mxu0 0
  %1405 = vmatpush1.bf16.msra.mxu0 0
  %1406 = vmatprep.subr.bf16.mxu0 0
  %1407 = vmatpush1.bf16.msra.mxu0 0
  %1408 = vmatprep.subr.bf16.mxu0 0
  %1409 = vmatpush1.bf16.msra.mxu0 0
  %1410 = vmatprep.subr.bf16.mxu0 0
  %1411 = vmatpush1.bf16.msra.mxu0 0
  %1412 = vmatprep.subr.bf16.mxu0 0
  %1413 = vmatpush1.bf16.msra.mxu0 0
  %1414 = vmatprep.mubr.bf16.mxu0 0
  %1415 = vmatmul.mubr.bf16.gmra.mrb[0].mxu0 %v1376
  %v1416 = vpop.f32.mrb[0].mxu0
  %v1417 = vadd.f32 %v1371, %v1416
  %v1418 = vpop.f32.mrb[0].mxu0
  %v1419 = vpop.f32.mrb[0].mxu0
  %v1420 = vpop.f32.mrb[0].mxu0
  %1421 = vdwg.mxu0
  %1422 = vst [vmem:[%s4] sm:$0xff] %v1417
  // Predicated region
  $region18: #{lstm_ehr_encoding_forward.1} parent=0 // pred_check
    _
  $region19: #{lstm_ehr_encoding_forward.1} parent=0 // pred_check_branch
    %1424 = sbr.rel (0) target = $region21
  $region20: #{lstm_ehr_encoding_forward.1} parent=0 // pred_region
    _
  $region21: #{lstm_ehr_encoding_forward.1} parent=0 // pred_fallthru
    _
  // Predicated region
  $region22: #{lstm_ehr_encoding_forward.1} parent=0 // pred_check
    _
  $region23: #{lstm_ehr_encoding_forward.1} parent=0 // pred_check_branch
    %1426 = sbr.rel (0) target = $region25
  $region24: #{lstm_ehr_encoding_forward.1} parent=0 // pred_region
    _
  $region25: #{lstm_ehr_encoding_forward.1} parent=0 // pred_fallthru
    _
  // Predicated region
  $region26: #{lstm_ehr_encoding_forward.1} parent=0 // pred_check
    _
  $region27: #{lstm_ehr_encoding_forward.1} parent=0 // pred_check_branch
    %1428 = sbr.rel (0) target = $region29
  $region28: #{lstm_ehr_encoding_forward.1} parent=0 // pred_region
    _
  $region29: #{lstm_ehr_encoding_forward.1} parent=0 // pred_fallthru
    _
  // Predicated region
  $region30: #{lstm_ehr_encoding_forward.1} parent=0 // pred_check
    _
  $region31: #{lstm_ehr_encoding_forward.1} parent=0 // pred_check_branch
    %1430 = sbr.rel (0) target = $region33
  $region32: #{lstm_ehr_encoding_forward.1} parent=0 // pred_region
    _
  $region33: #{lstm_ehr_encoding_forward.1} parent=0 // pred_fallthru
    _

</llo_original>
